<compile_context>
chip_gen: v7x
topology: tpu7x:2x2x1
jax: 0.10.0
libtpu: 0.0.40
codegen_flags: <defaults>
</compile_context>

<pallas_src>
import jax
import jax.numpy as jnp
from jax.experimental import pallas as pl
from jax.experimental.pallas import tpu as pltpu

EPS = 1e-5                      # nn.InstanceNorm2d default eps
_VMEM_LIMIT = 48 * 1024 * 1024  # safe on v5e/v6e (128 MiB) and v7x (64 MiB)


# ----------------------------- kernel helpers -----------------------------
def _conv3x3(x, w):
    """3x3 'valid' conv of a reflect-padded (pad=1) input; bf16 MXU, f32 acc.

    x: [H, W, C] (cast to bf16 for the MXU if needed)
    w: [3, 3, C, Co] bf16, indexed [ky, kx, ci, co]
    returns f32 [H, W, Co]
    """
    H, W, C = x.shape
    Co = w.shape[3]
    if x.dtype != jnp.bfloat16:
        x = x.astype(jnp.bfloat16)

    # Reflect pad of width 1 along H: leading (untiled) axis -> cheap tile copies.
    xh = jnp.concatenate([x[1:2], x, x[H - 2:H - 1]], axis=0)            # [H+2, W, C]

    # kx-shifted views along W (sublane axis).  Center view is xh itself (free);
    # only the two shifted views are materialized.
    v_left = jnp.concatenate([xh[:, 1:2], xh[:, :W - 1]], axis=1)        # column w-1 (reflect at w=0)
    v_right = jnp.concatenate([xh[:, 1:], xh[:, W - 2:W - 1]], axis=1)   # column w+1 (reflect at w=W-1)
    views = (v_left, xh, v_right)

    # 9 bf16 MXU matmuls (K = C), f32 accumulation; ky shifts are free
    # leading-axis slices; the first matmul initializes the accumulator.
    acc = None
    for ky in range(3):
        for kx in range(3):
            term = jnp.dot(views[kx][ky:ky + H].reshape(H * W, C), w[ky, kx],
                           preferred_element_type=jnp.float32)
            acc = term if acc is None else acc + term
    return acc.reshape(H, W, Co)


def _instance_norm(y):
    """InstanceNorm2d(affine=False): per-channel stats over H, W (biased var).

    Single-pass statistics (sum + sum of squares); var = E[y^2] - mean^2,
    clamped at 0 (eps covers the rest).  Adequate at the tested tolerances;
    switch to two-pass/Welford if tolerances tighten."""
    inv_n = 1.0 / (y.shape[0] * y.shape[1])
    s = jnp.sum(y, axis=(0, 1), keepdims=True)
    ss = jnp.sum(y * y, axis=(0, 1), keepdims=True)
    mean = s * inv_n
    var = jnp.maximum(ss * inv_n - mean * mean, 0.0)
    return (y - mean) * jax.lax.rsqrt(var + EPS)


# ------------------------------- the kernels -------------------------------
def conv_in_relu_kernel(x_ref, w_ref, h_ref):
    """conv1 (bias elided: cancelled by affine=False IN) + InstanceNorm + ReLU."""
    y = _instance_norm(_conv3x3(x_ref[0], w_ref[...]))
    h_ref[0] = jnp.maximum(y, 0.0).astype(h_ref.dtype)


def conv_in_residual_kernel(h_ref, x_ref, w_ref, o_ref):
    """conv2 (bias elided) + InstanceNorm + residual add."""
    y = _instance_norm(_conv3x3(h_ref[0], w_ref[...]))
    o_ref[0] = (x_ref[0].astype(jnp.float32) + y).astype(o_ref.dtype)


# ------------------------------- wrappers -----------------------------------
def _num_cout_blocks(C):
    # Split the conv output channels across a second "parallel" grid axis only
    # when the half stays lane-aligned (>= 128 lanes).  At the real CycleGAN
    # shape (C=256) this gives 2 independent grid steps per image so both v7x
    # TensorCores have work even for N == 1.
    return 2 if C % 256 == 0 else 1


def _compiler_params():
    return pltpu.CompilerParams(
        dimension_semantics=("parallel", "parallel"),
        vmem_limit_bytes=_VMEM_LIMIT)


def _conv1_call(x, w1):
    N, H, W, C = x.shape
    nco = _num_cout_blocks(C)
    co = C // nco
    cost = pl.CostEstimate(
        flops=2 * N * H * W * 9 * C * C,
        transcendentals=N * C,
        bytes_accessed=2 * N * H * W * C * 2 + 9 * C * C * 2)
    return pl.pallas_call(
        conv_in_relu_kernel,
        out_shape=jax.ShapeDtypeStruct((N, H, W, C), jnp.bfloat16),
        grid_spec=pltpu.PrefetchScalarGridSpec(
            num_scalar_prefetch=0,
            grid=(N, nco),
            in_specs=[
                pl.BlockSpec((1, H, W, C), lambda n, j: (n, 0, 0, 0)),
                pl.BlockSpec((3, 3, C, co), lambda n, j: (0, 0, 0, j)),
            ],
            out_specs=pl.BlockSpec((1, H, W, co), lambda n, j: (n, 0, 0, j)),
        ),
        compiler_params=_compiler_params(),
        cost_estimate=cost,
    )(x, w1)


def _conv2_call(h, x, w2, out_dtype):
    N, H, W, C = x.shape
    nco = _num_cout_blocks(C)
    co = C // nco
    out_bytes = N * H * W * C * jnp.dtype(out_dtype).itemsize
    cost = pl.CostEstimate(
        flops=2 * N * H * W * 9 * C * C,
        transcendentals=N * C,
        bytes_accessed=2 * N * H * W * C * 2 + 9 * C * C * 2 + out_bytes)
    return pl.pallas_call(
        conv_in_residual_kernel,
        out_shape=jax.ShapeDtypeStruct((N, H, W, C), out_dtype),
        grid_spec=pltpu.PrefetchScalarGridSpec(
            num_scalar_prefetch=0,
            grid=(N, nco),
            in_specs=[
                pl.BlockSpec((1, H, W, C), lambda n, j: (n, 0, 0, 0)),   # h (full C)
                pl.BlockSpec((1, H, W, co), lambda n, j: (n, 0, 0, j)),  # x (residual slice)
                pl.BlockSpec((3, 3, C, co), lambda n, j: (0, 0, 0, j)),  # w2
            ],
            out_specs=pl.BlockSpec((1, H, W, co), lambda n, j: (n, 0, 0, j)),
        ),
        compiler_params=_compiler_params(),
        cost_estimate=cost,
    )(h, x, w2)


def prepare_params(w1_oihw, w2_oihw):
    """One-time weight conversion: OIHW -> [ky, kx, ci, co] bf16."""
    def prep(w):
        w = jnp.asarray(w, jnp.float32)
        return jnp.transpose(w, (2, 3, 1, 0)).astype(jnp.bfloat16)
    return prep(w1_oihw), prep(w2_oihw)


def resnet_block_nhwc(x_nhwc, w1_r, w2_r, out_dtype=None):
    """Hot path: x in NHWC bf16, weights from prepare_params().

    Two fused pallas_calls: conv1+IN+ReLU (bf16 to HBM), conv2+IN+residual."""
    out_dtype = out_dtype if out_dtype is not None else x_nhwc.dtype
    h = _conv1_call(x_nhwc, w1_r)
    return _conv2_call(h, x_nhwc, w2_r, out_dtype)


def resnet_block(x_nchw, w1_oihw, b1, w2_oihw, b2):
    """Parity wrapper matching the PyTorch module I/O (NCHW f32, OIHW + bias).

    Conv biases are accepted for API parity but not used: a per-channel
    constant added before InstanceNorm2d(affine=False) is exactly cancelled by
    the mean subtraction, so the forward output is unchanged.  (Only valid for
    an affine-free norm applied immediately after each conv, as here.)"""
    del b1, b2
    w1_r, w2_r = prepare_params(w1_oihw, w2_oihw)
    x = jnp.transpose(x_nchw, (0, 2, 3, 1)).astype(jnp.bfloat16)   # NCHW -> NHWC bf16
    out = resnet_block_nhwc(x, w1_r, w2_r, out_dtype=jnp.float32)
    return jnp.transpose(out, (0, 3, 1, 2))                        # NHWC -> NCHW


# --------------------------- pure-JAX reference ----------------------------
def resnet_block_ref(x_nchw, w1_oihw, b1, w2_oihw, b2):
    """Full-fidelity f32 reference (biases applied, as in the PyTorch module)."""
    x = jnp.transpose(x_nchw, (0, 2, 3, 1)).astype(jnp.float32)
    w1 = jnp.transpose(w1_oihw, (2, 3, 1, 0)).astype(jnp.float32)
    w2 = jnp.transpose(w2_oihw, (2, 3, 1, 0)).astype(jnp.float32)

    def conv(a, w, b):
        ap = jnp.pad(a, ((0, 0), (1, 1), (1, 1), (0, 0)), mode="reflect")
        y = jax.lax.conv_general_dilated(
            ap, w, (1, 1), "VALID",
            dimension_numbers=("NHWC", "HWIO", "NHWC"))
        return y + b.reshape(1, 1, 1, -1)

    def inorm(y):
        m = jnp.mean(y, axis=(1, 2), keepdims=True)
        v = jnp.mean((y - m) ** 2, axis=(1, 2), keepdims=True)
        return (y - m) * jax.lax.rsqrt(v + EPS)

    h = jax.nn.relu(inorm(conv(x, w1, b1)))
    h = inorm(conv(h, w2, b2))
    out = x + h
    return jnp.transpose(out, (0, 3, 1, 2))


# --------------------------------- main -------------------------------------
if __name__ == "__main__":
    N, C, H, W = 2, 4, 16, 16   # dim = 4 (demo; real CycleGAN is C=256, 64x64)

    key = jax.random.PRNGKey(0)
    kx, kw1, kb1, kw2, kb2 = jax.random.split(key, 5)

    x = jax.random.normal(kx, (N, C, H, W), dtype=jnp.float32)
    # Deterministic synthetic parameters (PyTorch Conv2d shapes: OIHW + bias).
    w1 = 0.1 * jax.random.normal(kw1, (C, C, 3, 3), dtype=jnp.float32)
    b1 = 0.1 * jax.random.normal(kb1, (C,), dtype=jnp.float32)
    w2 = 0.1 * jax.random.normal(kw2, (C, C, 3, 3), dtype=jnp.float32)
    b2 = 0.1 * jax.random.normal(kb2, (C,), dtype=jnp.float32)

    out = resnet_block(x, w1, b1, w2, b2)
    out = jax.block_until_ready(out)

    ref = jax.block_until_ready(resnet_block_ref(x, w1, b1, w2, b2))
    assert out.shape == (N, C, H, W)
    # Tolerance accounts for bf16 MXU matmuls plus bf16 input / inter-conv
    # activation storage (f32 InstanceNorm + residual math inside the kernel).
    max_err = jnp.max(jnp.abs(out - ref))
    assert jnp.allclose(out, ref, atol=1e-1, rtol=5e-2), \
        f"max abs err = {max_err}"

    print("KERNEL_OK")
</pallas_src>

<mosaic_0001>
module attributes {stable_mosaic.version = 11 : i64} {
  func.func @conv_in_relu_kernel(%arg0: i32, %arg1: i32, %arg2: memref<1x16x16x4xbf16, #tpu.memory_space<vmem>>, %arg3: memref<3x3x4x4xbf16, #tpu.memory_space<vmem>>, %arg4: memref<1x16x16x4xbf16, #tpu.memory_space<vmem>>) attributes {dimension_semantics = [#tpu.dimension_semantics<parallel>, #tpu.dimension_semantics<parallel>], iteration_bounds = array<i64: 2, 1>, scalar_prefetch = 0 : i64, scratch_operands = 0 : i64, tpu.core_type = #tpu.core_type<tc>, window_params = [{transform_indices = @transform_0, window_bounds = array<i64: 1, 16, 16, 4>}, {transform_indices = @transform_1, window_bounds = array<i64: 3, 3, 4, 4>}, {transform_indices = @transform_2, window_bounds = array<i64: 1, 16, 16, 4>}]} {
    %c0 = arith.constant 0 : index
    %c0_0 = arith.constant 0 : index
    %c0_1 = arith.constant 0 : index
    %c0_2 = arith.constant 0 : index
    %0 = vector.load %arg2[%c0, %c0_0, %c0_1, %c0_2] : memref<1x16x16x4xbf16, #tpu.memory_space<vmem>>, vector<1x16x16x4xbf16>
    %1 = vector.shape_cast %0 : vector<1x16x16x4xbf16> to vector<16x16x4xbf16>
    %c0_3 = arith.constant 0 : index
    %c0_4 = arith.constant 0 : index
    %c0_5 = arith.constant 0 : index
    %c0_6 = arith.constant 0 : index
    %2 = vector.load %arg3[%c0_3, %c0_4, %c0_5, %c0_6] : memref<3x3x4x4xbf16, #tpu.memory_space<vmem>>, vector<3x3x4x4xbf16>
    %3 = vector.extract_strided_slice %1 {offsets = [1, 0, 0], sizes = [1, 16, 4], strides = [1, 1, 1]} : vector<16x16x4xbf16> to vector<1x16x4xbf16>
    %4 = vector.extract_strided_slice %1 {offsets = [14, 0, 0], sizes = [1, 16, 4], strides = [1, 1, 1]} : vector<16x16x4xbf16> to vector<1x16x4xbf16>
    %5 = tpu.concatenate %3, %1, %4 in 0 : vector<1x16x4xbf16>, vector<16x16x4xbf16>, vector<1x16x4xbf16> -> vector<18x16x4xbf16>
    %6 = vector.extract_strided_slice %5 {offsets = [0, 1, 0], sizes = [18, 1, 4], strides = [1, 1, 1]} : vector<18x16x4xbf16> to vector<18x1x4xbf16>
    %7 = vector.extract_strided_slice %5 {offsets = [0, 0, 0], sizes = [18, 15, 4], strides = [1, 1, 1]} : vector<18x16x4xbf16> to vector<18x15x4xbf16>
    %8 = tpu.concatenate %6, %7 in 1 : vector<18x1x4xbf16>, vector<18x15x4xbf16> -> vector<18x16x4xbf16>
    %9 = vector.extract_strided_slice %5 {offsets = [0, 1, 0], sizes = [18, 15, 4], strides = [1, 1, 1]} : vector<18x16x4xbf16> to vector<18x15x4xbf16>
    %10 = vector.extract_strided_slice %5 {offsets = [0, 14, 0], sizes = [18, 1, 4], strides = [1, 1, 1]} : vector<18x16x4xbf16> to vector<18x1x4xbf16>
    %11 = tpu.concatenate %9, %10 in 1 : vector<18x15x4xbf16>, vector<18x1x4xbf16> -> vector<18x16x4xbf16>
    %12 = vector.extract_strided_slice %8 {offsets = [0, 0, 0], sizes = [16, 16, 4], strides = [1, 1, 1]} : vector<18x16x4xbf16> to vector<16x16x4xbf16>
    %13 = vector.shape_cast %12 : vector<16x16x4xbf16> to vector<256x4xbf16>
    %14 = vector.extract_strided_slice %2 {offsets = [0, 0, 0, 0], sizes = [1, 1, 4, 4], strides = [1, 1, 1, 1]} : vector<3x3x4x4xbf16> to vector<1x1x4x4xbf16>
    %15 = vector.shape_cast %14 : vector<1x1x4x4xbf16> to vector<4x4xbf16>
    %cst = arith.constant dense<0.000000e+00> : vector<256x4xf32>
    %16 = tpu.matmul %13, %15, %cst {dimension_numbers = #tpu.dot_dimension_numbers<[1], [0], [0], [1], [0, 0, 1, 1], [], []>} : vector<256x4xbf16>, vector<4x4xbf16>, vector<256x4xf32> -> vector<256x4xf32>
    %17 = vector.extract_strided_slice %5 {offsets = [0, 0, 0], sizes = [16, 16, 4], strides = [1, 1, 1]} : vector<18x16x4xbf16> to vector<16x16x4xbf16>
    %18 = vector.shape_cast %17 : vector<16x16x4xbf16> to vector<256x4xbf16>
    %19 = vector.extract_strided_slice %2 {offsets = [0, 1, 0, 0], sizes = [1, 1, 4, 4], strides = [1, 1, 1, 1]} : vector<3x3x4x4xbf16> to vector<1x1x4x4xbf16>
    %20 = vector.shape_cast %19 : vector<1x1x4x4xbf16> to vector<4x4xbf16>
    %cst_7 = arith.constant dense<0.000000e+00> : vector<256x4xf32>
    %21 = tpu.matmul %18, %20, %cst_7 {dimension_numbers = #tpu.dot_dimension_numbers<[1], [0], [0], [1], [0, 0, 1, 1], [], []>} : vector<256x4xbf16>, vector<4x4xbf16>, vector<256x4xf32> -> vector<256x4xf32>
    %22 = arith.addf %16, %21 : vector<256x4xf32>
    %23 = vector.extract_strided_slice %11 {offsets = [0, 0, 0], sizes = [16, 16, 4], strides = [1, 1, 1]} : vector<18x16x4xbf16> to vector<16x16x4xbf16>
    %24 = vector.shape_cast %23 : vector<16x16x4xbf16> to vector<256x4xbf16>
    %25 = vector.extract_strided_slice %2 {offsets = [0, 2, 0, 0], sizes = [1, 1, 4, 4], strides = [1, 1, 1, 1]} : vector<3x3x4x4xbf16> to vector<1x1x4x4xbf16>
    %26 = vector.shape_cast %25 : vector<1x1x4x4xbf16> to vector<4x4xbf16>
    %cst_8 = arith.constant dense<0.000000e+00> : vector<256x4xf32>
    %27 = tpu.matmul %24, %26, %cst_8 {dimension_numbers = #tpu.dot_dimension_numbers<[1], [0], [0], [1], [0, 0, 1, 1], [], []>} : vector<256x4xbf16>, vector<4x4xbf16>, vector<256x4xf32> -> vector<256x4xf32>
    %28 = arith.addf %22, %27 : vector<256x4xf32>
    %29 = vector.extract_strided_slice %8 {offsets = [1, 0, 0], sizes = [16, 16, 4], strides = [1, 1, 1]} : vector<18x16x4xbf16> to vector<16x16x4xbf16>
    %30 = vector.shape_cast %29 : vector<16x16x4xbf16> to vector<256x4xbf16>
    %31 = vector.extract_strided_slice %2 {offsets = [1, 0, 0, 0], sizes = [1, 1, 4, 4], strides = [1, 1, 1, 1]} : vector<3x3x4x4xbf16> to vector<1x1x4x4xbf16>
    %32 = vector.shape_cast %31 : vector<1x1x4x4xbf16> to vector<4x4xbf16>
    %cst_9 = arith.constant dense<0.000000e+00> : vector<256x4xf32>
    %33 = tpu.matmul %30, %32, %cst_9 {dimension_numbers = #tpu.dot_dimension_numbers<[1], [0], [0], [1], [0, 0, 1, 1], [], []>} : vector<256x4xbf16>, vector<4x4xbf16>, vector<256x4xf32> -> vector<256x4xf32>
    %34 = arith.addf %28, %33 : vector<256x4xf32>
    %35 = vector.extract_strided_slice %5 {offsets = [1, 0, 0], sizes = [16, 16, 4], strides = [1, 1, 1]} : vector<18x16x4xbf16> to vector<16x16x4xbf16>
    %36 = vector.shape_cast %35 : vector<16x16x4xbf16> to vector<256x4xbf16>
    %37 = vector.extract_strided_slice %2 {offsets = [1, 1, 0, 0], sizes = [1, 1, 4, 4], strides = [1, 1, 1, 1]} : vector<3x3x4x4xbf16> to vector<1x1x4x4xbf16>
    %38 = vector.shape_cast %37 : vector<1x1x4x4xbf16> to vector<4x4xbf16>
    %cst_10 = arith.constant dense<0.000000e+00> : vector<256x4xf32>
    %39 = tpu.matmul %36, %38, %cst_10 {dimension_numbers = #tpu.dot_dimension_numbers<[1], [0], [0], [1], [0, 0, 1, 1], [], []>} : vector<256x4xbf16>, vector<4x4xbf16>, vector<256x4xf32> -> vector<256x4xf32>
    %40 = arith.addf %34, %39 : vector<256x4xf32>
    %41 = vector.extract_strided_slice %11 {offsets = [1, 0, 0], sizes = [16, 16, 4], strides = [1, 1, 1]} : vector<18x16x4xbf16> to vector<16x16x4xbf16>
    %42 = vector.shape_cast %41 : vector<16x16x4xbf16> to vector<256x4xbf16>
    %43 = vector.extract_strided_slice %2 {offsets = [1, 2, 0, 0], sizes = [1, 1, 4, 4], strides = [1, 1, 1, 1]} : vector<3x3x4x4xbf16> to vector<1x1x4x4xbf16>
    %44 = vector.shape_cast %43 : vector<1x1x4x4xbf16> to vector<4x4xbf16>
    %cst_11 = arith.constant dense<0.000000e+00> : vector<256x4xf32>
    %45 = tpu.matmul %42, %44, %cst_11 {dimension_numbers = #tpu.dot_dimension_numbers<[1], [0], [0], [1], [0, 0, 1, 1], [], []>} : vector<256x4xbf16>, vector<4x4xbf16>, vector<256x4xf32> -> vector<256x4xf32>
    %46 = arith.addf %40, %45 : vector<256x4xf32>
    %47 = vector.extract_strided_slice %8 {offsets = [2, 0, 0], sizes = [16, 16, 4], strides = [1, 1, 1]} : vector<18x16x4xbf16> to vector<16x16x4xbf16>
    %48 = vector.shape_cast %47 : vector<16x16x4xbf16> to vector<256x4xbf16>
    %49 = vector.extract_strided_slice %2 {offsets = [2, 0, 0, 0], sizes = [1, 1, 4, 4], strides = [1, 1, 1, 1]} : vector<3x3x4x4xbf16> to vector<1x1x4x4xbf16>
    %50 = vector.shape_cast %49 : vector<1x1x4x4xbf16> to vector<4x4xbf16>
    %cst_12 = arith.constant dense<0.000000e+00> : vector<256x4xf32>
    %51 = tpu.matmul %48, %50, %cst_12 {dimension_numbers = #tpu.dot_dimension_numbers<[1], [0], [0], [1], [0, 0, 1, 1], [], []>} : vector<256x4xbf16>, vector<4x4xbf16>, vector<256x4xf32> -> vector<256x4xf32>
    %52 = arith.addf %46, %51 : vector<256x4xf32>
    %53 = vector.extract_strided_slice %5 {offsets = [2, 0, 0], sizes = [16, 16, 4], strides = [1, 1, 1]} : vector<18x16x4xbf16> to vector<16x16x4xbf16>
    %54 = vector.shape_cast %53 : vector<16x16x4xbf16> to vector<256x4xbf16>
    %55 = vector.extract_strided_slice %2 {offsets = [2, 1, 0, 0], sizes = [1, 1, 4, 4], strides = [1, 1, 1, 1]} : vector<3x3x4x4xbf16> to vector<1x1x4x4xbf16>
    %56 = vector.shape_cast %55 : vector<1x1x4x4xbf16> to vector<4x4xbf16>
    %cst_13 = arith.constant dense<0.000000e+00> : vector<256x4xf32>
    %57 = tpu.matmul %54, %56, %cst_13 {dimension_numbers = #tpu.dot_dimension_numbers<[1], [0], [0], [1], [0, 0, 1, 1], [], []>} : vector<256x4xbf16>, vector<4x4xbf16>, vector<256x4xf32> -> vector<256x4xf32>
    %58 = arith.addf %52, %57 : vector<256x4xf32>
    %59 = vector.extract_strided_slice %11 {offsets = [2, 0, 0], sizes = [16, 16, 4], strides = [1, 1, 1]} : vector<18x16x4xbf16> to vector<16x16x4xbf16>
    %60 = vector.shape_cast %59 : vector<16x16x4xbf16> to vector<256x4xbf16>
    %61 = vector.extract_strided_slice %2 {offsets = [2, 2, 0, 0], sizes = [1, 1, 4, 4], strides = [1, 1, 1, 1]} : vector<3x3x4x4xbf16> to vector<1x1x4x4xbf16>
    %62 = vector.shape_cast %61 : vector<1x1x4x4xbf16> to vector<4x4xbf16>
    %cst_14 = arith.constant dense<0.000000e+00> : vector<256x4xf32>
    %63 = tpu.matmul %60, %62, %cst_14 {dimension_numbers = #tpu.dot_dimension_numbers<[1], [0], [0], [1], [0, 0, 1, 1], [], []>} : vector<256x4xbf16>, vector<4x4xbf16>, vector<256x4xf32> -> vector<256x4xf32>
    %64 = arith.addf %58, %63 : vector<256x4xf32>
    %65 = vector.shape_cast %64 : vector<256x4xf32> to vector<16x16x4xf32>
    %cst_15 = arith.constant dense<0.000000e+00> : vector<4xf32>
    %66 = vector.multi_reduction <add>, %65, %cst_15 [0, 1] : vector<16x16x4xf32> to vector<4xf32>
    %67 = vector.shape_cast %66 : vector<4xf32> to vector<1x1x4xf32>
    %68 = arith.mulf %65, %65 : vector<16x16x4xf32>
    %cst_16 = arith.constant dense<0.000000e+00> : vector<4xf32>
    %69 = vector.multi_reduction <add>, %68, %cst_16 [0, 1] : vector<16x16x4xf32> to vector<4xf32>
    %70 = vector.shape_cast %69 : vector<4xf32> to vector<1x1x4xf32>
    %cst_17 = arith.constant 3.906250e-03 : f32
    %71 = vector.broadcast %cst_17 : f32 to vector<1x1x4xf32>
    %72 = arith.mulf %67, %71 : vector<1x1x4xf32>
    %cst_18 = arith.constant 3.906250e-03 : f32
    %73 = vector.broadcast %cst_18 : f32 to vector<1x1x4xf32>
    %74 = arith.mulf %70, %73 : vector<1x1x4xf32>
    %75 = arith.mulf %72, %72 : vector<1x1x4xf32>
    %76 = arith.subf %74, %75 : vector<1x1x4xf32>
    %cst_19 = arith.constant 0.000000e+00 : f32
    %77 = vector.broadcast %cst_19 : f32 to vector<1x1x4xf32>
    %78 = arith.maximumf %76, %77 : vector<1x1x4xf32>
    %79 = vector.broadcast %72 : vector<1x1x4xf32> to vector<16x16x4xf32>
    %80 = arith.subf %65, %79 : vector<16x16x4xf32>
    %cst_20 = arith.constant 9.99999974E-6 : f32
    %81 = vector.broadcast %cst_20 : f32 to vector<1x1x4xf32>
    %82 = arith.addf %78, %81 : vector<1x1x4xf32>
    %83 = math.rsqrt %82 : vector<1x1x4xf32>
    %84 = vector.broadcast %83 : vector<1x1x4xf32> to vector<16x16x4xf32>
    %85 = arith.mulf %80, %84 : vector<16x16x4xf32>
    %cst_21 = arith.constant 0.000000e+00 : f32
    %86 = vector.broadcast %cst_21 : f32 to vector<16x16x4xf32>
    %87 = arith.maximumf %85, %86 : vector<16x16x4xf32>
    %88 = arith.truncf %87 : vector<16x16x4xf32> to vector<16x16x4xbf16>
    %c0_22 = arith.constant 0 : index
    %c0_23 = arith.constant 0 : index
    %c0_24 = arith.constant 0 : index
    %c0_25 = arith.constant 0 : index
    %89 = vector.load %arg4[%c0_22, %c0_23, %c0_24, %c0_25] : memref<1x16x16x4xbf16, #tpu.memory_space<vmem>>, vector<1x16x16x4xbf16>
    %90 = vector.shape_cast %89 : vector<1x16x16x4xbf16> to vector<16x16x4xbf16>
    %91 = vector.shape_cast %88 : vector<16x16x4xbf16> to vector<1x16x16x4xbf16>
    tpu.vector_store %arg4[%c0_22, %c0_23, %c0_24, %c0_25], %91 {strides = array<i32>} : memref<1x16x16x4xbf16, #tpu.memory_space<vmem>>, vector<1x16x16x4xbf16>,
    return
  }
  func.func @transform_0(%arg0: i32, %arg1: i32) -> (i32, i32, i32, i32) {
    %c0_i32 = arith.constant 0 : i32
    %c0_i32_0 = arith.constant 0 : i32
    %c0_i32_1 = arith.constant 0 : i32
    %c0_i32_2 = arith.constant 0 : i32
    return %arg0, %c0_i32, %c0_i32_0, %c0_i32_1 : i32, i32, i32, i32
  }
  func.func @transform_1(%arg0: i32, %arg1: i32) -> (i32, i32, i32, i32) {
    %c0_i32 = arith.constant 0 : i32
    %c0_i32_0 = arith.constant 0 : i32
    %c0_i32_1 = arith.constant 0 : i32
    %c0_i32_2 = arith.constant 0 : i32
    return %c0_i32, %c0_i32_0, %c0_i32_1, %arg1 : i32, i32, i32, i32
  }
  func.func @transform_2(%arg0: i32, %arg1: i32) -> (i32, i32, i32, i32) {
    %c0_i32 = arith.constant 0 : i32
    %c0_i32_0 = arith.constant 0 : i32
    %c0_i32_1 = arith.constant 0 : i32
    return %arg0, %c0_i32, %c0_i32_0, %arg1 : i32, i32, i32, i32
  }
}

</mosaic_0001>

<llo_original>
// kernel: tpu_custom_call.1
$region0: #{tpu_custom_call.1}
  #allocation0 [shape = 'u32[]', space=smem, size = 0x4, offset = 0x4, fixed_abs, tag = 'smem constant byte address 0x4 - core index']
  #allocation1 [shape = 'u32[144,128]{1,0:T(1,128)}', space=vmem, size = 0x12000, scoped, tag = 'internal scratch']
  %s0 = inlined_call_operand.vmem [shape: bf16[2,16,16,4], index: 0, kind: input, shape index: {}]
  %s1 = inlined_call_operand.vmem [shape: bf16[3,3,4,4], index: 1, kind: input, shape index: {}]
  %s2 = inlined_call_operand.vmem [shape: bf16[2,16,16,4], index: 2, kind: output, shape index: {}]
  %s3 = sld [smem:[#allocation0]]
  $region41: #{tpu_custom_call.1} parent=0
    _
  %s5 = ssub.s32 1, %s3
  %s6 = scalar_select 0, %s5, %s3
  loop: start=0, step=1, limit=4
  $region2: #{tpu_custom_call.1} parent=0 // loop_pre_header
    _
  $region3: #{tpu_custom_call.1} parent=0 // loop_header
    %s8 = sphi 0, %s12
    %p9 = scmp.ge.s32.totalorder %s8, 4
    %s15 = sphi 0, %s27
    %s16 = sphi 0, %s23
    %s17 = sphi 0, %s15
    %s18 = sphi 0, %s16
    %s19 = sphi 0, %s17
    %s20 = sphi 0, %s18
    %s30 = sphi 0, %s32
    %s33 = sphi 0, %s30
    %s34 = sphi 0, %s33
    %s50 = sphi 0, %s34
    %s56 = sphi 0, %s58
    %s59 = sphi 0, %s56
    %s60 = sphi 0, %s59
    %s76 = sphi 0, %s60
    %s84 = sphi 0, %s86
    %s87 = sphi 0, %s84
    %s88 = sphi 0, %s87
    %s104 = sphi 0, %s88
  $region4: #{tpu_custom_call.1} parent=0 // loop_header_branch
    %11 = sbr.rel (%p9) target = $region8
  $region5: #{tpu_custom_call.1} parent=0 // loop_body
    %s13 = ssub.s32 %s8, 1
    %s14 = ssub.s32 %s8, 2
    %s21 = sadd.s32 1, %s16
    %p22 = scmp.ge.s32.totalorder %s21, 1
    %s23 = scalar_select %p22, 0, %s21
    %s24 = sadd.s32 1, %s15
    %s25 = scalar_select %p22, %s24, %s15
    %p26 = scmp.ge.s32.totalorder %s25, 2
    %s27 = scalar_select %p26, 0, %s25
    %s28 = ssub.s32 %s15, %s27
    %p29 = scmp.eq.s32.totalorder %s28, 0
    %s31 = sadd.s32 %s30, 1
    %s32 = scalar_select %p29, %s30, %s31
    %p35 = pneg %p29
    %p36 = scmp.eq.s32.totalorder %s8, 1
    %p37 = por %p35, %p36
    %p38 = scmp.ne.s32.totalorder %s30, %s33
    %p39 = scmp.eq.s32.totalorder %s8, 0
    %p40 = por %p38, %p39
    %p41 = scmp.ne.s32.totalorder %s30, %s33
    %p42 = scmp.eq.s32.totalorder %s13, 1
    %p43 = por %p41, %p42
    %p44 = scmp.ne.s32.totalorder %s33, %s34
    %p45 = scmp.eq.s32.totalorder %s13, 0
    %p46 = por %p44, %p45
    %p47 = scmp.ne.s32.totalorder %s33, %s34
    %p48 = scmp.eq.s32.totalorder %s14, 1
    %p49 = por %p47, %p48
    %p51 = scmp.ne.s32.totalorder %s34, %s50
    %p52 = scmp.eq.s32.totalorder %s14, 0
    %p53 = por %p51, %p52
    %s54 = ssub.s32 %s16, %s23
    %p55 = scmp.eq.s32.totalorder %s54, 0
    %s57 = sadd.s32 %s56, 1
    %s58 = scalar_select %p55, %s56, %s57
    %p61 = pneg %p55
    %p62 = scmp.eq.s32.totalorder %s8, 1
    %p63 = por %p61, %p62
    %p64 = scmp.ne.s32.totalorder %s56, %s59
    %p65 = scmp.eq.s32.totalorder %s8, 0
    %p66 = por %p64, %p65
    %p67 = scmp.ne.s32.totalorder %s56, %s59
    %p68 = scmp.eq.s32.totalorder %s13, 1
    %p69 = por %p67, %p68
    %p70 = scmp.ne.s32.totalorder %s59, %s60
    %p71 = scmp.eq.s32.totalorder %s13, 0
    %p72 = por %p70, %p71
    %p73 = scmp.ne.s32.totalorder %s59, %s60
    %p74 = scmp.eq.s32.totalorder %s14, 1
    %p75 = por %p73, %p74
    %p77 = scmp.ne.s32.totalorder %s60, %s76
    %p78 = scmp.eq.s32.totalorder %s14, 0
    %p79 = por %p77, %p78
    %s80 = ssub.s32 %s15, %s27
    %s81 = ssub.s32 %s16, %s23
    %s82 = sor.u32 %s80, %s81
    %p83 = scmp.eq.s32.totalorder %s82, 0
    %s85 = sadd.s32 %s84, 1
    %s86 = scalar_select %p83, %s84, %s85
    %p89 = pneg %p83
    %p90 = scmp.eq.s32.totalorder %s8, 1
    %p91 = por %p89, %p90
    %p92 = scmp.ne.s32.totalorder %s84, %s87
    %p93 = scmp.eq.s32.totalorder %s8, 0
    %p94 = por %p92, %p93
    %p95 = scmp.ne.s32.totalorder %s84, %s87
    %p96 = scmp.eq.s32.totalorder %s13, 1
    %p97 = por %p95, %p96
    %p98 = scmp.ne.s32.totalorder %s87, %s88
    %p99 = scmp.eq.s32.totalorder %s13, 0
    %p100 = por %p98, %p99
    %p101 = scmp.ne.s32.totalorder %s87, %s88
    %p102 = scmp.eq.s32.totalorder %s14, 1
    %p103 = por %p101, %p102
    %p105 = scmp.ne.s32.totalorder %s88, %s104
    %p106 = scmp.eq.s32.totalorder %s14, 0
    %p107 = por %p105, %p106
    %p108 = scmp.le.s32.totalorder 1, %s8
    %p109 = scmp.lt.s32.totalorder %s8, 3
    %p110 = pnand %p108, %p109
    %p111 = pneg %p110
    // Predicated region
    $region9: #{tpu_custom_call.1} parent=5 // pred_check
      _
    $region10: #{tpu_custom_call.1} parent=5 // pred_check_branch
      %113 = sbr.rel (%p110) target = $region12
    $region11: #{tpu_custom_call.1} parent=5 // pred_region
      %s114 = ssub.s32 %s8, 1
      // Predicated region
      $region13: #{tpu_custom_call.1} parent=11 // pred_check
        %p115 = pneg %p72
      $region14: #{tpu_custom_call.1} parent=11 // pred_check_branch
        %117 = sbr.rel (%p115) target = $region16
      $region15: #{tpu_custom_call.1} parent=11 // pred_region
        %p118 = scmp.lt.s32.totalorder %s18, 0
        %s119 = scalar_select %p118, %s18, 0
        %s120 = smul.addr %s119, 2
        %s121 = scalar_lea.vmem %s1, %s120
      $region16: #{tpu_custom_call.1} parent=11 // pred_fallthru
        _
    $region12: #{tpu_custom_call.1} parent=5 // pred_fallthru
      _
    %p122 = scmp.lt.s32.totalorder %s8, 2
    // Predicated region
    $region17: #{tpu_custom_call.1} parent=5 // pred_check
      %p123 = pneg %p122
    $region18: #{tpu_custom_call.1} parent=5 // pred_check_branch
      %125 = sbr.rel (%p123) target = $region20
    $region19: #{tpu_custom_call.1} parent=5 // pred_region
      // Predicated region
      $region21: #{tpu_custom_call.1} parent=19 // pred_check
        %p126 = pneg %p40
      $region22: #{tpu_custom_call.1} parent=19 // pred_check_branch
        %128 = sbr.rel (%p126) target = $region24
      $region23: #{tpu_custom_call.1} parent=19 // pred_region
        %p129 = scmp.lt.s32.totalorder %s15, 1
        %s130 = scalar_select %p129, %s15, 1
        %s131 = smul.addr %s130, 32
        %s132 = smul.addr %s131, 4
        %s133 = scalar_lea.vmem %s0, %s132
      $region24: #{tpu_custom_call.1} parent=19 // pred_fallthru
        _
    $region20: #{tpu_custom_call.1} parent=5 // pred_fallthru
      _
    %p134 = scmp.le.s32.totalorder 1, %s8
    %p135 = scmp.lt.s32.totalorder %s8, 3
    %p136 = pnand %p134, %p135
    %p137 = pneg %p136
    // Predicated region
    $region25: #{tpu_custom_call.1} parent=5 // pred_check
      _
    $region26: #{tpu_custom_call.1} parent=5 // pred_check_branch
      %139 = sbr.rel (%p136) target = $region28
    $region27: #{tpu_custom_call.1} parent=5 // pred_region
      %s140 = ssub.s32 %s8, 1
      %p141 = scmp.lt.s32.totalorder %s17, 1
      %s142 = scalar_select %p141, %s17, 1
      %s143 = smul.addr %s142, 32
      %s144 = smul.addr %s143, 4
      %s145 = scalar_lea.vmem %s0, %s144
      %p146 = pneg %p46
      %p147 = pneg %p43
      %p148 = scmp.lt.s32.totalorder %s18, 0
      %s149 = scalar_select %p148, %s18, 0
      %s150 = smul.addr %s149, 2
      %s151 = scalar_lea.vmem %s1, %s150
      %p152 = pneg %p72
      %p153 = pneg %p69
      %p154 = pneg %p100
      %p155 = pneg %p97
      %p156 = scmp.lt.s32.totalorder %s17, 1
      %s157 = scalar_select %p156, %s17, 1
      %p158 = scmp.lt.s32.totalorder %s18, 0
      %s159 = scalar_select %p158, %s18, 0
      %s160 = smul.addr %s157, 32
      %s161 = sadd.s32 %s159, %s160
      %s162 = smul.addr %s161, 4
      %s163 = scalar_lea.vmem %s2, %s162
      %p164 = scmp.lt.s32.totalorder %s17, 1
      %s165 = scalar_select %p164, %s17, 1
      %s166 = smul.addr %s165, 32
      %s167 = smul.addr %s166, 4
      %s168 = scalar_lea.vmem %s0, %s167
      %p169 = scmp.lt.s32.totalorder %s18, 0
      %s170 = scalar_select %p169, %s18, 0
      %s171 = smul.addr %s170, 2
      %s172 = scalar_lea.vmem %s1, %s171
      %p173 = scmp.lt.s32.totalorder %s17, 1
      %s174 = scalar_select %p173, %s17, 1
      %p175 = scmp.lt.s32.totalorder %s18, 0
      %s176 = scalar_select %p175, %s18, 0
      %s177 = smul.addr %s174, 32
      %s178 = sadd.s32 %s176, %s177
      %s179 = smul.addr %s178, 4
      %s180 = scalar_lea.vmem %s2, %s179
      %v182 = vld [vmem:[%s168] sm:$0xf]
      %v183 = vld [vmem:[%s168 + $0x4] sm:$0xf]
      %v184 = vld [vmem:[%s168 + $0x8] sm:$0xf]
      %v185 = vld [vmem:[%s168 + $0xc] sm:$0xf]
      %v186 = vld [vmem:[%s168 + $0x10] sm:$0xf]
      %v187 = vld [vmem:[%s168 + $0x14] sm:$0xf]
      %v188 = vld [vmem:[%s168 + $0x18] sm:$0xf]
      %v189 = vld [vmem:[%s168 + $0x1c] sm:$0xf]
      %v190 = vld [vmem:[%s168 + $0x20] sm:$0xf]
      %v191 = vld [vmem:[%s168 + $0x24] sm:$0xf]
      %v192 = vld [vmem:[%s168 + $0x28] sm:$0xf]
      %v193 = vld [vmem:[%s168 + $0x2c] sm:$0xf]
      %v194 = vld [vmem:[%s168 + $0x30] sm:$0xf]
      %v195 = vld [vmem:[%s168 + $0x34] sm:$0xf]
      %v196 = vld [vmem:[%s168 + $0x38] sm:$0xf]
      %v197 = vld [vmem:[%s168 + $0x3c] sm:$0xf]
      %v198 = vld [vmem:[%s168 + $0x40] sm:$0xf]
      %v199 = vld [vmem:[%s168 + $0x44] sm:$0xf]
      %v200 = vld [vmem:[%s168 + $0x48] sm:$0xf]
      %v201 = vld [vmem:[%s168 + $0x4c] sm:$0xf]
      %v202 = vld [vmem:[%s168 + $0x50] sm:$0xf]
      %v203 = vld [vmem:[%s168 + $0x54] sm:$0xf]
      %v204 = vld [vmem:[%s168 + $0x58] sm:$0xf]
      %v205 = vld [vmem:[%s168 + $0x5c] sm:$0xf]
      %v206 = vld [vmem:[%s168 + $0x60] sm:$0xf]
      %v207 = vld [vmem:[%s168 + $0x64] sm:$0xf]
      %v208 = vld [vmem:[%s168 + $0x68] sm:$0xf]
      %v209 = vld [vmem:[%s168 + $0x6c] sm:$0xf]
      %v210 = vld [vmem:[%s168 + $0x70] sm:$0xf]
      %v211 = vld [vmem:[%s168 + $0x74] sm:$0xf]
      %v212 = vld [vmem:[%s168 + $0x78] sm:$0xf]
      %v213 = vld [vmem:[%s168 + $0x7c] sm:$0xf]
      %v214 = vld [vmem:[%s172] sm:$0x3]
      %v215 = vld [vmem:[%s172 + $0x2] sm:$0x3]
      %v216 = vld [vmem:[%s172 + $0x4] sm:$0x3]
      %v217 = vld [vmem:[%s172 + $0x6] sm:$0x3]
      %v218 = vld [vmem:[%s172 + $0x8] sm:$0x3]
      %v219 = vld [vmem:[%s172 + $0xa] sm:$0x3]
      %v220 = vld [vmem:[%s172 + $0xc] sm:$0x3]
      %v221 = vld [vmem:[%s172 + $0xe] sm:$0x3]
      %v222 = vld [vmem:[%s172 + $0x10] sm:$0x3]
      %v239 = vunpack.c.l.b16 %v184
      %v240 = vunpack.c.l.b16 %v182
      %v241 = vunpack.c.l.b16 %v186
      %v242 = vunpack.c.l.b16 %v188
      %v243 = vunpack.c.l.b16 %v190
      %v244 = vunpack.c.l.b16 %v192
      %v245 = vunpack.c.l.b16 %v194
      %v246 = vunpack.c.l.b16 %v196
      %v247 = vunpack.c.l.b16 %v198
      %v248 = vunpack.c.l.b16 %v200
      %v249 = vunpack.c.l.b16 %v202
      %v250 = vunpack.c.l.b16 %v204
      %v251 = vunpack.c.l.b16 %v206
      %v252 = vunpack.c.l.b16 %v208
      %v253 = vunpack.c.l.b16 %v210
      %v254 = vunpack.c.l.b16 %v212
      %v255 = vpack.c.b16 %v239, %v239
      %v256 = vpack.c.b16 %v240, %v240
      %v257 = vpack.c.b16 %v241, %v241
      %v258 = vpack.c.b16 %v242, %v242
      %v259 = vpack.c.b16 %v243, %v243
      %v260 = vpack.c.b16 %v244, %v244
      %v261 = vpack.c.b16 %v245, %v245
      %v262 = vpack.c.b16 %v246, %v246
      %v263 = vpack.c.b16 %v247, %v247
      %v264 = vpack.c.b16 %v248, %v248
      %v265 = vpack.c.b16 %v249, %v249
      %v266 = vpack.c.b16 %v250, %v250
      %v267 = vpack.c.b16 %v251, %v251
      %v268 = vpack.c.b16 %v252, %v252
      %v269 = vpack.c.b16 %v253, %v253
      %v270 = vpack.c.b16 %v254, %v254
      %v272 = vshrl.u32 %v255, 16
      %v275 = vshrl.u32 %v256, 16
      %v278 = vshrl.u32 %v257, 16
      %v281 = vshrl.u32 %v258, 16
      %v284 = vshrl.u32 %v259, 16
      %v287 = vshrl.u32 %v260, 16
      %v290 = vshrl.u32 %v261, 16
      %v293 = vshrl.u32 %v262, 16
      %v296 = vshrl.u32 %v263, 16
      %v299 = vshrl.u32 %v264, 16
      %v302 = vshrl.u32 %v265, 16
      %v305 = vshrl.u32 %v266, 16
      %v308 = vshrl.u32 %v267, 16
      %v311 = vshrl.u32 %v268, 16
      %v314 = vshrl.u32 %v269, 16
      %v317 = vshrl.u32 %v270, 16
      %v351 = vunpack.c.l.b16 %v185
      %v352 = vunpack.c.l.b16 %v183
      %v353 = vunpack.c.l.b16 %v187
      %v354 = vunpack.c.l.b16 %v189
      %v355 = vunpack.c.l.b16 %v191
      %v356 = vunpack.c.l.b16 %v193
      %v357 = vunpack.c.l.b16 %v195
      %v358 = vunpack.c.l.b16 %v197
      %v359 = vunpack.c.l.b16 %v199
      %v360 = vunpack.c.l.b16 %v201
      %v361 = vunpack.c.l.b16 %v203
      %v362 = vunpack.c.l.b16 %v205
      %v363 = vunpack.c.l.b16 %v207
      %v364 = vunpack.c.l.b16 %v209
      %v365 = vunpack.c.l.b16 %v211
      %v366 = vunpack.c.l.b16 %v213
      %v367 = vpack.c.b16 %v351, %v239
      %v368 = vpack.c.b16 %v352, %v240
      %v369 = vpack.c.b16 %v353, %v241
      %v370 = vpack.c.b16 %v354, %v242
      %v371 = vpack.c.b16 %v355, %v243
      %v372 = vpack.c.b16 %v356, %v244
      %v373 = vpack.c.b16 %v357, %v245
      %v374 = vpack.c.b16 %v358, %v246
      %v375 = vpack.c.b16 %v359, %v247
      %v376 = vpack.c.b16 %v360, %v248
      %v377 = vpack.c.b16 %v361, %v249
      %v378 = vpack.c.b16 %v362, %v250
      %v379 = vpack.c.b16 %v363, %v251
      %v380 = vpack.c.b16 %v364, %v252
      %v381 = vpack.c.b16 %v365, %v253
      %v382 = vpack.c.b16 %v366, %v254
      %v384 = vshrl.u32 %v367, 16
      %v386 = vrot.slane %v384, 7
      %v387 = vshll.u32 %v367, 16
      %v389 = vor.u32 %v386, %v387
      %v391 = vshrl.u32 %v368, 16
      %v393 = vrot.slane %v391, 7
      %v394 = vshll.u32 %v368, 16
      %v396 = vor.u32 %v393, %v394
      %v398 = vshrl.u32 %v369, 16
      %v400 = vrot.slane %v398, 7
      %v401 = vshll.u32 %v369, 16
      %v403 = vor.u32 %v400, %v401
      %v405 = vshrl.u32 %v370, 16
      %v407 = vrot.slane %v405, 7
      %v408 = vshll.u32 %v370, 16
      %v410 = vor.u32 %v407, %v408
      %v412 = vshrl.u32 %v371, 16
      %v414 = vrot.slane %v412, 7
      %v415 = vshll.u32 %v371, 16
      %v417 = vor.u32 %v414, %v415
      %v419 = vshrl.u32 %v372, 16
      %v421 = vrot.slane %v419, 7
      %v422 = vshll.u32 %v372, 16
      %v424 = vor.u32 %v421, %v422
      %v426 = vshrl.u32 %v373, 16
      %v428 = vrot.slane %v426, 7
      %v429 = vshll.u32 %v373, 16
      %v431 = vor.u32 %v428, %v429
      %v433 = vshrl.u32 %v374, 16
      %v435 = vrot.slane %v433, 7
      %v436 = vshll.u32 %v374, 16
      %v438 = vor.u32 %v435, %v436
      %v440 = vshrl.u32 %v375, 16
      %v442 = vrot.slane %v440, 7
      %v443 = vshll.u32 %v375, 16
      %v445 = vor.u32 %v442, %v443
      %v447 = vshrl.u32 %v376, 16
      %v449 = vrot.slane %v447, 7
      %v450 = vshll.u32 %v376, 16
      %v452 = vor.u32 %v449, %v450
      %v454 = vshrl.u32 %v377, 16
      %v456 = vrot.slane %v454, 7
      %v457 = vshll.u32 %v377, 16
      %v459 = vor.u32 %v456, %v457
      %v461 = vshrl.u32 %v378, 16
      %v463 = vrot.slane %v461, 7
      %v464 = vshll.u32 %v378, 16
      %v466 = vor.u32 %v463, %v464
      %v468 = vshrl.u32 %v379, 16
      %v470 = vrot.slane %v468, 7
      %v471 = vshll.u32 %v379, 16
      %v473 = vor.u32 %v470, %v471
      %v475 = vshrl.u32 %v380, 16
      %v477 = vrot.slane %v475, 7
      %v478 = vshll.u32 %v380, 16
      %v480 = vor.u32 %v477, %v478
      %v482 = vshrl.u32 %v381, 16
      %v484 = vrot.slane %v482, 7
      %v485 = vshll.u32 %v381, 16
      %v487 = vor.u32 %v484, %v485
      %v489 = vshrl.u32 %v382, 16
      %v491 = vrot.slane %v489, 7
      %v492 = vshll.u32 %v382, 16
      %v494 = vor.u32 %v491, %v492
      %vm511 = vcmask 1040384
      %vm512 = vsmask.f32 256
      %vm513 = vmand %vm511, %vm512
      %v514 = vsel %vm513, %v272, %v389
      %v515 = vsel %vm513, %v275, %v396
      %v516 = vsel %vm513, %v278, %v403
      %v517 = vsel %vm513, %v281, %v410
      %v518 = vsel %vm513, %v284, %v417
      %v519 = vsel %vm513, %v287, %v424
      %v520 = vsel %vm513, %v290, %v431
      %v521 = vsel %vm513, %v293, %v438
      %v522 = vsel %vm513, %v296, %v445
      %v523 = vsel %vm513, %v299, %v452
      %v524 = vsel %vm513, %v302, %v459
      %v525 = vsel %vm513, %v305, %v466
      %v526 = vsel %vm513, %v308, %v473
      %v527 = vsel %vm513, %v311, %v480
      %v528 = vsel %vm513, %v314, %v487
      %v529 = vsel %vm513, %v317, %v494
      %v530 = vrot.slane %v387, 1
      %v531 = vor.u32 %v384, %v530
      %v532 = vrot.slane %v394, 1
      %v533 = vor.u32 %v391, %v532
      %v534 = vrot.slane %v401, 1
      %v535 = vor.u32 %v398, %v534
      %v536 = vrot.slane %v408, 1
      %v537 = vor.u32 %v405, %v536
      %v538 = vrot.slane %v415, 1
      %v539 = vor.u32 %v412, %v538
      %v540 = vrot.slane %v422, 1
      %v541 = vor.u32 %v419, %v540
      %v542 = vrot.slane %v429, 1
      %v543 = vor.u32 %v426, %v542
      %v544 = vrot.slane %v436, 1
      %v545 = vor.u32 %v433, %v544
      %v546 = vrot.slane %v443, 1
      %v547 = vor.u32 %v440, %v546
      %v548 = vrot.slane %v450, 1
      %v549 = vor.u32 %v447, %v548
      %v550 = vrot.slane %v457, 1
      %v551 = vor.u32 %v454, %v550
      %v552 = vrot.slane %v464, 1
      %v553 = vor.u32 %v461, %v552
      %v554 = vrot.slane %v471, 1
      %v555 = vor.u32 %v468, %v554
      %v556 = vrot.slane %v478, 1
      %v557 = vor.u32 %v475, %v556
      %v558 = vrot.slane %v485, 1
      %v559 = vor.u32 %v482, %v558
      %v560 = vrot.slane %v492, 1
      %v561 = vor.u32 %v489, %v560
      %v578 = vpack.c.b16 %v351, %v351
      %v579 = vpack.c.b16 %v352, %v352
      %v580 = vpack.c.b16 %v353, %v353
      %v581 = vpack.c.b16 %v354, %v354
      %v582 = vpack.c.b16 %v355, %v355
      %v583 = vpack.c.b16 %v356, %v356
      %v584 = vpack.c.b16 %v357, %v357
      %v585 = vpack.c.b16 %v358, %v358
      %v586 = vpack.c.b16 %v359, %v359
      %v587 = vpack.c.b16 %v360, %v360
      %v588 = vpack.c.b16 %v361, %v361
      %v589 = vpack.c.b16 %v362, %v362
      %v590 = vpack.c.b16 %v363, %v363
      %v591 = vpack.c.b16 %v364, %v364
      %v592 = vpack.c.b16 %v365, %v365
      %v593 = vpack.c.b16 %v366, %v366
      %v595 = vshll.u32 %v578, 16
      %v597 = vrot.slane %v595, 4
      %v599 = vshll.u32 %v579, 16
      %v601 = vrot.slane %v599, 4
      %v603 = vshll.u32 %v580, 16
      %v605 = vrot.slane %v603, 4
      %v607 = vshll.u32 %v581, 16
      %v609 = vrot.slane %v607, 4
      %v611 = vshll.u32 %v582, 16
      %v613 = vrot.slane %v611, 4
      %v615 = vshll.u32 %v583, 16
      %v617 = vrot.slane %v615, 4
      %v619 = vshll.u32 %v584, 16
      %v621 = vrot.slane %v619, 4
      %v623 = vshll.u32 %v585, 16
      %v625 = vrot.slane %v623, 4
      %v627 = vshll.u32 %v586, 16
      %v629 = vrot.slane %v627, 4
      %v631 = vshll.u32 %v587, 16
      %v633 = vrot.slane %v631, 4
      %v635 = vshll.u32 %v588, 16
      %v637 = vrot.slane %v635, 4
      %v639 = vshll.u32 %v589, 16
      %v641 = vrot.slane %v639, 4
      %v643 = vshll.u32 %v590, 16
      %v645 = vrot.slane %v643, 4
      %v647 = vshll.u32 %v591, 16
      %v649 = vrot.slane %v647, 4
      %v651 = vshll.u32 %v592, 16
      %v653 = vrot.slane %v651, 4
      %v655 = vshll.u32 %v593, 16
      %v657 = vrot.slane %v655, 4
      %vm674 = vcmask 1047552
      %vm675 = vsmask.f32 7424
      %vm676 = vmand %vm674, %vm675
      %v677 = vsel %vm676, %v531, %v597
      %v678 = vsel %vm676, %v533, %v601
      %v679 = vsel %vm676, %v535, %v605
      %v680 = vsel %vm676, %v537, %v609
      %v681 = vsel %vm676, %v539, %v613
      %v682 = vsel %vm676, %v541, %v617
      %v683 = vsel %vm676, %v543, %v621
      %v684 = vsel %vm676, %v545, %v625
      %v685 = vsel %vm676, %v547, %v629
      %v686 = vsel %vm676, %v549, %v633
      %v687 = vsel %vm676, %v551, %v637
      %v688 = vsel %vm676, %v553, %v641
      %v689 = vsel %vm676, %v555, %v645
      %v690 = vsel %vm676, %v557, %v649
      %v691 = vsel %vm676, %v559, %v653
      %v692 = vsel %vm676, %v561, %v657
      %vm693 = vcmask 31744
      %v694 = vsel %vm693, %v367, 0
      %v696 = vsel %vm693, %v368, 0
      %v698 = vsel %vm693, %v369, 0
      %v700 = vsel %vm693, %v370, 0
      %v702 = vsel %vm693, %v371, 0
      %v704 = vsel %vm693, %v372, 0
      %v706 = vsel %vm693, %v373, 0
      %v708 = vsel %vm693, %v374, 0
      %v710 = vsel %vm693, %v375, 0
      %v712 = vsel %vm693, %v376, 0
      %v714 = vsel %vm693, %v377, 0
      %v716 = vsel %vm693, %v378, 0
      %v718 = vsel %vm693, %v379, 0
      %v720 = vsel %vm693, %v380, 0
      %v722 = vsel %vm693, %v381, 0
      %vm724 = vcmask 1041408
      %v726 = vsel %vm724, %v215, 0
      %728 = vmatprep.subr.bf16.mxu0 0
      %729 = vmatpush1.bf16.msra.mxu0 %v726
      %730 = vmatprep.subr.bf16.mxu0 0
      %731 = vmatpush1.bf16.msra.mxu0 0
      %732 = vmatprep.subr.bf16.mxu0 0
      %733 = vmatpush1.bf16.msra.mxu0 0
      %734 = vmatprep.subr.bf16.mxu0 0
      %735 = vmatpush1.bf16.msra.mxu0 0
      %736 = vmatprep.subr.bf16.mxu0 0
      %737 = vmatpush1.bf16.msra.mxu0 0
      %738 = vmatprep.subr.bf16.mxu0 0
      %739 = vmatpush1.bf16.msra.mxu0 0
      %740 = vmatprep.subr.bf16.mxu0 0
      %741 = vmatpush1.bf16.msra.mxu0 0
      %742 = vmatprep.subr.bf16.mxu0 0
      %743 = vmatpush1.bf16.msra.mxu0 0
      %744 = vmatprep.subr.bf16.mxu0 0
      %745 = vmatpush1.bf16.msra.mxu0 0
      %746 = vmatprep.subr.bf16.mxu0 0
      %747 = vmatpush1.bf16.msra.mxu0 0
      %748 = vmatprep.subr.bf16.mxu0 0
      %749 = vmatpush1.bf16.msra.mxu0 0
      %750 = vmatprep.subr.bf16.mxu0 0
      %751 = vmatpush1.bf16.msra.mxu0 0
      %752 = vmatprep.subr.bf16.mxu0 0
      %753 = vmatpush1.bf16.msra.mxu0 0
      %754 = vmatprep.subr.bf16.mxu0 0
      %755 = vmatpush1.bf16.msra.mxu0 0
      %756 = vmatprep.subr.bf16.mxu0 0
      %757 = vmatpush1.bf16.msra.mxu0 0
      %758 = vmatprep.subr.bf16.mxu0 0
      %759 = vmatpush1.bf16.msra.mxu0 0
      %760 = vmatprep.mubr.bf16.mxu0 0
      %761 = vmatmul.mubr.bf16.gmra.mrb[0].mxu0 %v694
      %v762 = vpop.f32.mrb[0].mxu0
      %v763 = vadd.f32 0.0, %v762
      %v764 = vpop.f32.mrb[0].mxu0
      %v765 = vpop.f32.mrb[0].mxu0
      %v766 = vadd.f32 0.0, %v765
      %v767 = vpop.f32.mrb[0].mxu0
      %768 = vmatprep.mubr.bf16.mxu0 0
      %769 = vmatmul.mubr.bf16.gmra.mrb[0].mxu0 %v696
      %v770 = vpop.f32.mrb[0].mxu0
      %v771 = vadd.f32 0.0, %v770
      %v772 = vpop.f32.mrb[0].mxu0
      %v773 = vpop.f32.mrb[0].mxu0
      %v774 = vadd.f32 0.0, %v773
      %v775 = vpop.f32.mrb[0].mxu0
      %776 = vmatprep.mubr.bf16.mxu0 0
      %777 = vmatmul.mubr.bf16.gmra.mrb[0].mxu0 %v694
      %v778 = vpop.f32.mrb[0].mxu0
      %v779 = vadd.f32 0.0, %v778
      %v780 = vpop.f32.mrb[0].mxu0
      %v781 = vpop.f32.mrb[0].mxu0
      %v782 = vadd.f32 0.0, %v781
      %v783 = vpop.f32.mrb[0].mxu0
      %784 = vmatprep.mubr.bf16.mxu0 0
      %785 = vmatmul.mubr.bf16.gmra.mrb[0].mxu0 %v698
      %v786 = vpop.f32.mrb[0].mxu0
      %v787 = vadd.f32 0.0, %v786
      %v788 = vpop.f32.mrb[0].mxu0
      %v789 = vpop.f32.mrb[0].mxu0
      %v790 = vadd.f32 0.0, %v789
      %v791 = vpop.f32.mrb[0].mxu0
      %792 = vmatprep.mubr.bf16.mxu0 0
      %793 = vmatmul.mubr.bf16.gmra.mrb[0].mxu0 %v700
      %v794 = vpop.f32.mrb[0].mxu0
      %v795 = vadd.f32 0.0, %v794
      %v796 = vpop.f32.mrb[0].mxu0
      %v797 = vpop.f32.mrb[0].mxu0
      %v798 = vadd.f32 0.0, %v797
      %v799 = vpop.f32.mrb[0].mxu0
      %800 = vmatprep.mubr.bf16.mxu0 0
      %801 = vmatmul.mubr.bf16.gmra.mrb[0].mxu0 %v702
      %v802 = vpop.f32.mrb[0].mxu0
      %v803 = vadd.f32 0.0, %v802
      %v804 = vpop.f32.mrb[0].mxu0
      %v805 = vpop.f32.mrb[0].mxu0
      %v806 = vadd.f32 0.0, %v805
      %v807 = vpop.f32.mrb[0].mxu0
      %808 = vmatprep.mubr.bf16.mxu0 0
      %809 = vmatmul.mubr.bf16.gmra.mrb[0].mxu0 %v704
      %v810 = vpop.f32.mrb[0].mxu0
      %v811 = vadd.f32 0.0, %v810
      %v812 = vpop.f32.mrb[0].mxu0
      %v813 = vpop.f32.mrb[0].mxu0
      %v814 = vadd.f32 0.0, %v813
      %v815 = vpop.f32.mrb[0].mxu0
      %816 = vmatprep.mubr.bf16.mxu0 0
      %817 = vmatmul.mubr.bf16.gmra.mrb[0].mxu0 %v706
      %v818 = vpop.f32.mrb[0].mxu0
      %v819 = vadd.f32 0.0, %v818
      %v820 = vpop.f32.mrb[0].mxu0
      %v821 = vpop.f32.mrb[0].mxu0
      %v822 = vadd.f32 0.0, %v821
      %v823 = vpop.f32.mrb[0].mxu0
      %824 = vmatprep.mubr.bf16.mxu0 0
      %825 = vmatmul.mubr.bf16.gmra.mrb[0].mxu0 %v708
      %v826 = vpop.f32.mrb[0].mxu0
      %v827 = vadd.f32 0.0, %v826
      %v828 = vpop.f32.mrb[0].mxu0
      %v829 = vpop.f32.mrb[0].mxu0
      %v830 = vadd.f32 0.0, %v829
      %v831 = vpop.f32.mrb[0].mxu0
      %832 = vmatprep.mubr.bf16.mxu0 0
      %833 = vmatmul.mubr.bf16.gmra.mrb[0].mxu0 %v710
      %v834 = vpop.f32.mrb[0].mxu0
      %v835 = vadd.f32 0.0, %v834
      %v836 = vpop.f32.mrb[0].mxu0
      %v837 = vpop.f32.mrb[0].mxu0
      %v838 = vadd.f32 0.0, %v837
      %v839 = vpop.f32.mrb[0].mxu0
      %840 = vmatprep.mubr.bf16.mxu0 0
      %841 = vmatmul.mubr.bf16.gmra.mrb[0].mxu0 %v712
      %v842 = vpop.f32.mrb[0].mxu0
      %v843 = vadd.f32 0.0, %v842
      %v844 = vpop.f32.mrb[0].mxu0
      %v845 = vpop.f32.mrb[0].mxu0
      %v846 = vadd.f32 0.0, %v845
      %v847 = vpop.f32.mrb[0].mxu0
      %848 = vmatprep.mubr.bf16.mxu0 0
      %849 = vmatmul.mubr.bf16.gmra.mrb[0].mxu0 %v714
      %v850 = vpop.f32.mrb[0].mxu0
      %v851 = vadd.f32 0.0, %v850
      %v852 = vpop.f32.mrb[0].mxu0
      %v853 = vpop.f32.mrb[0].mxu0
      %v854 = vadd.f32 0.0, %v853
      %v855 = vpop.f32.mrb[0].mxu0
      %856 = vmatprep.mubr.bf16.mxu0 0
      %857 = vmatmul.mubr.bf16.gmra.mrb[0].mxu0 %v716
      %v858 = vpop.f32.mrb[0].mxu0
      %v859 = vadd.f32 0.0, %v858
      %v860 = vpop.f32.mrb[0].mxu0
      %v861 = vpop.f32.mrb[0].mxu0
      %v862 = vadd.f32 0.0, %v861
      %v863 = vpop.f32.mrb[0].mxu0
      %864 = vmatprep.mubr.bf16.mxu0 0
      %865 = vmatmul.mubr.bf16.gmra.mrb[0].mxu0 %v718
      %v866 = vpop.f32.mrb[0].mxu0
      %v867 = vadd.f32 0.0, %v866
      %v868 = vpop.f32.mrb[0].mxu0
      %v869 = vpop.f32.mrb[0].mxu0
      %v870 = vadd.f32 0.0, %v869
      %v871 = vpop.f32.mrb[0].mxu0
      %872 = vmatprep.mubr.bf16.mxu0 0
      %873 = vmatmul.mubr.bf16.gmra.mrb[0].mxu0 %v720
      %v874 = vpop.f32.mrb[0].mxu0
      %v875 = vadd.f32 0.0, %v874
      %v876 = vpop.f32.mrb[0].mxu0
      %v877 = vpop.f32.mrb[0].mxu0
      %v878 = vadd.f32 0.0, %v877
      %v879 = vpop.f32.mrb[0].mxu0
      %880 = vmatprep.mubr.bf16.mxu0 0
      %881 = vmatmul.mubr.bf16.gmra.mrb[0].mxu0 %v722
      %v882 = vpop.f32.mrb[0].mxu0
      %v883 = vadd.f32 0.0, %v882
      %v884 = vpop.f32.mrb[0].mxu0
      %v885 = vpop.f32.mrb[0].mxu0
      %v886 = vadd.f32 0.0, %v885
      %v887 = vpop.f32.mrb[0].mxu0
      %888 = vdwg.mxu0
      %v890 = vsel %vm693, %v514, 0
      %v893 = vsel %vm693, %v515, 0
      %v896 = vsel %vm693, %v516, 0
      %v899 = vsel %vm693, %v517, 0
      %v902 = vsel %vm693, %v518, 0
      %v905 = vsel %vm693, %v519, 0
      %v908 = vsel %vm693, %v520, 0
      %v911 = vsel %vm693, %v521, 0
      %v914 = vsel %vm693, %v522, 0
      %v917 = vsel %vm693, %v523, 0
      %v920 = vsel %vm693, %v524, 0
      %v923 = vsel %vm693, %v525, 0
      %v926 = vsel %vm693, %v526, 0
      %v929 = vsel %vm693, %v527, 0
      %v932 = vsel %vm693, %v528, 0
      %v935 = vsel %vm724, %v214, 0
      %937 = vmatprep.subr.bf16.mxu0 0
      %938 = vmatpush1.bf16.msra.mxu0 %v935
      %939 = vmatprep.subr.bf16.mxu0 0
      %940 = vmatpush1.bf16.msra.mxu0 0
      %941 = vmatprep.subr.bf16.mxu0 0
      %942 = vmatpush1.bf16.msra.mxu0 0
      %943 = vmatprep.subr.bf16.mxu0 0
      %944 = vmatpush1.bf16.msra.mxu0 0
      %945 = vmatprep.subr.bf16.mxu0 0
      %946 = vmatpush1.bf16.msra.mxu0 0
      %947 = vmatprep.subr.bf16.mxu0 0
      %948 = vmatpush1.bf16.msra.mxu0 0
      %949 = vmatprep.subr.bf16.mxu0 0
      %950 = vmatpush1.bf16.msra.mxu0 0
      %951 = vmatprep.subr.bf16.mxu0 0
      %952 = vmatpush1.bf16.msra.mxu0 0
      %953 = vmatprep.subr.bf16.mxu0 0
      %954 = vmatpush1.bf16.msra.mxu0 0
      %955 = vmatprep.subr.bf16.mxu0 0
      %956 = vmatpush1.bf16.msra.mxu0 0
      %957 = vmatprep.subr.bf16.mxu0 0
      %958 = vmatpush1.bf16.msra.mxu0 0
      %959 = vmatprep.subr.bf16.mxu0 0
      %960 = vmatpush1.bf16.msra.mxu0 0
      %961 = vmatprep.subr.bf16.mxu0 0
      %962 = vmatpush1.bf16.msra.mxu0 0
      %963 = vmatprep.subr.bf16.mxu0 0
      %964 = vmatpush1.bf16.msra.mxu0 0
      %965 = vmatprep.subr.bf16.mxu0 0
      %966 = vmatpush1.bf16.msra.mxu0 0
      %967 = vmatprep.subr.bf16.mxu0 0
      %968 = vmatpush1.bf16.msra.mxu0 0
      %969 = vmatprep.mubr.bf16.mxu0 0
      %970 = vmatmul.mubr.bf16.gmra.mrb[0].mxu0 %v890
      %v971 = vpop.f32.mrb[0].mxu0
      %v972 = vadd.f32 %v763, %v971
      %v973 = vpop.f32.mrb[0].mxu0
      %v974 = vpop.f32.mrb[0].mxu0
      %v975 = vadd.f32 %v766, %v974
      %v976 = vpop.f32.mrb[0].mxu0
      %977 = vmatprep.mubr.bf16.mxu0 0
      %978 = vmatmul.mubr.bf16.gmra.mrb[0].mxu0 %v893
      %v979 = vpop.f32.mrb[0].mxu0
      %v980 = vadd.f32 %v771, %v979
      %v981 = vpop.f32.mrb[0].mxu0
      %v982 = vpop.f32.mrb[0].mxu0
      %v983 = vadd.f32 %v774, %v982
      %v984 = vpop.f32.mrb[0].mxu0
      %985 = vmatprep.mubr.bf16.mxu0 0
      %986 = vmatmul.mubr.bf16.gmra.mrb[0].mxu0 %v890
      %v987 = vpop.f32.mrb[0].mxu0
      %v988 = vadd.f32 %v779, %v987
      %v989 = vpop.f32.mrb[0].mxu0
      %v990 = vpop.f32.mrb[0].mxu0
      %v991 = vadd.f32 %v782, %v990
      %v992 = vpop.f32.mrb[0].mxu0
      %993 = vmatprep.mubr.bf16.mxu0 0
      %994 = vmatmul.mubr.bf16.gmra.mrb[0].mxu0 %v896
      %v995 = vpop.f32.mrb[0].mxu0
      %v996 = vadd.f32 %v787, %v995
      %v997 = vpop.f32.mrb[0].mxu0
      %v998 = vpop.f32.mrb[0].mxu0
      %v999 = vadd.f32 %v790, %v998
      %v1000 = vpop.f32.mrb[0].mxu0
      %1001 = vmatprep.mubr.bf16.mxu0 0
      %1002 = vmatmul.mubr.bf16.gmra.mrb[0].mxu0 %v899
      %v1003 = vpop.f32.mrb[0].mxu0
      %v1004 = vadd.f32 %v795, %v1003
      %v1005 = vpop.f32.mrb[0].mxu0
      %v1006 = vpop.f32.mrb[0].mxu0
      %v1007 = vadd.f32 %v798, %v1006
      %v1008 = vpop.f32.mrb[0].mxu0
      %1009 = vmatprep.mubr.bf16.mxu0 0
      %1010 = vmatmul.mubr.bf16.gmra.mrb[0].mxu0 %v902
      %v1011 = vpop.f32.mrb[0].mxu0
      %v1012 = vadd.f32 %v803, %v1011
      %v1013 = vpop.f32.mrb[0].mxu0
      %v1014 = vpop.f32.mrb[0].mxu0
      %v1015 = vadd.f32 %v806, %v1014
      %v1016 = vpop.f32.mrb[0].mxu0
      %1017 = vmatprep.mubr.bf16.mxu0 0
      %1018 = vmatmul.mubr.bf16.gmra.mrb[0].mxu0 %v905
      %v1019 = vpop.f32.mrb[0].mxu0
      %v1020 = vadd.f32 %v811, %v1019
      %v1021 = vpop.f32.mrb[0].mxu0
      %v1022 = vpop.f32.mrb[0].mxu0
      %v1023 = vadd.f32 %v814, %v1022
      %v1024 = vpop.f32.mrb[0].mxu0
      %1025 = vmatprep.mubr.bf16.mxu0 0
      %1026 = vmatmul.mubr.bf16.gmra.mrb[0].mxu0 %v908
      %v1027 = vpop.f32.mrb[0].mxu0
      %v1028 = vadd.f32 %v819, %v1027
      %v1029 = vpop.f32.mrb[0].mxu0
      %v1030 = vpop.f32.mrb[0].mxu0
      %v1031 = vadd.f32 %v822, %v1030
      %v1032 = vpop.f32.mrb[0].mxu0
      %1033 = vmatprep.mubr.bf16.mxu0 0
      %1034 = vmatmul.mubr.bf16.gmra.mrb[0].mxu0 %v911
      %v1035 = vpop.f32.mrb[0].mxu0
      %v1036 = vadd.f32 %v827, %v1035
      %v1037 = vpop.f32.mrb[0].mxu0
      %v1038 = vpop.f32.mrb[0].mxu0
      %v1039 = vadd.f32 %v830, %v1038
      %v1040 = vpop.f32.mrb[0].mxu0
      %1041 = vmatprep.mubr.bf16.mxu0 0
      %1042 = vmatmul.mubr.bf16.gmra.mrb[0].mxu0 %v914
      %v1043 = vpop.f32.mrb[0].mxu0
      %v1044 = vadd.f32 %v835, %v1043
      %v1045 = vpop.f32.mrb[0].mxu0
      %v1046 = vpop.f32.mrb[0].mxu0
      %v1047 = vadd.f32 %v838, %v1046
      %v1048 = vpop.f32.mrb[0].mxu0
      %1049 = vmatprep.mubr.bf16.mxu0 0
      %1050 = vmatmul.mubr.bf16.gmra.mrb[0].mxu0 %v917
      %v1051 = vpop.f32.mrb[0].mxu0
      %v1052 = vadd.f32 %v843, %v1051
      %v1053 = vpop.f32.mrb[0].mxu0
      %v1054 = vpop.f32.mrb[0].mxu0
      %v1055 = vadd.f32 %v846, %v1054
      %v1056 = vpop.f32.mrb[0].mxu0
      %1057 = vmatprep.mubr.bf16.mxu0 0
      %1058 = vmatmul.mubr.bf16.gmra.mrb[0].mxu0 %v920
      %v1059 = vpop.f32.mrb[0].mxu0
      %v1060 = vadd.f32 %v851, %v1059
      %v1061 = vpop.f32.mrb[0].mxu0
      %v1062 = vpop.f32.mrb[0].mxu0
      %v1063 = vadd.f32 %v854, %v1062
      %v1064 = vpop.f32.mrb[0].mxu0
      %1065 = vmatprep.mubr.bf16.mxu0 0
      %1066 = vmatmul.mubr.bf16.gmra.mrb[0].mxu0 %v923
      %v1067 = vpop.f32.mrb[0].mxu0
      %v1068 = vadd.f32 %v859, %v1067
      %v1069 = vpop.f32.mrb[0].mxu0
      %v1070 = vpop.f32.mrb[0].mxu0
      %v1071 = vadd.f32 %v862, %v1070
      %v1072 = vpop.f32.mrb[0].mxu0
      %1073 = vmatprep.mubr.bf16.mxu0 0
      %1074 = vmatmul.mubr.bf16.gmra.mrb[0].mxu0 %v926
      %v1075 = vpop.f32.mrb[0].mxu0
      %v1076 = vadd.f32 %v867, %v1075
      %v1077 = vpop.f32.mrb[0].mxu0
      %v1078 = vpop.f32.mrb[0].mxu0
      %v1079 = vadd.f32 %v870, %v1078
      %v1080 = vpop.f32.mrb[0].mxu0
      %1081 = vmatprep.mubr.bf16.mxu0 0
      %1082 = vmatmul.mubr.bf16.gmra.mrb[0].mxu0 %v929
      %v1083 = vpop.f32.mrb[0].mxu0
      %v1084 = vadd.f32 %v875, %v1083
      %v1085 = vpop.f32.mrb[0].mxu0
      %v1086 = vpop.f32.mrb[0].mxu0
      %v1087 = vadd.f32 %v878, %v1086
      %v1088 = vpop.f32.mrb[0].mxu0
      %1089 = vmatprep.mubr.bf16.mxu0 0
      %1090 = vmatmul.mubr.bf16.gmra.mrb[0].mxu0 %v932
      %v1091 = vpop.f32.mrb[0].mxu0
      %v1092 = vadd.f32 %v883, %v1091
      %v1093 = vpop.f32.mrb[0].mxu0
      %v1094 = vpop.f32.mrb[0].mxu0
      %v1095 = vadd.f32 %v886, %v1094
      %v1096 = vpop.f32.mrb[0].mxu0
      %1097 = vdwg.mxu0
      %v1099 = vsel %vm693, %v677, 0
      %v1102 = vsel %vm693, %v678, 0
      %v1105 = vsel %vm693, %v679, 0
      %v1108 = vsel %vm693, %v680, 0
      %v1111 = vsel %vm693, %v681, 0
      %v1114 = vsel %vm693, %v682, 0
      %v1117 = vsel %vm693, %v683, 0
      %v1120 = vsel %vm693, %v684, 0
      %v1123 = vsel %vm693, %v685, 0
      %v1126 = vsel %vm693, %v686, 0
      %v1129 = vsel %vm693, %v687, 0
      %v1132 = vsel %vm693, %v688, 0
      %v1135 = vsel %vm693, %v689, 0
      %v1138 = vsel %vm693, %v690, 0
      %v1141 = vsel %vm693, %v691, 0
      %v1144 = vsel %vm724, %v216, 0
      %1146 = vmatprep.subr.bf16.mxu0 0
      %1147 = vmatpush1.bf16.msra.mxu0 %v1144
      %1148 = vmatprep.subr.bf16.mxu0 0
      %1149 = vmatpush1.bf16.msra.mxu0 0
      %1150 = vmatprep.subr.bf16.mxu0 0
      %1151 = vmatpush1.bf16.msra.mxu0 0
      %1152 = vmatprep.subr.bf16.mxu0 0
      %1153 = vmatpush1.bf16.msra.mxu0 0
      %1154 = vmatprep.subr.bf16.mxu0 0
      %1155 = vmatpush1.bf16.msra.mxu0 0
      %1156 = vmatprep.subr.bf16.mxu0 0
      %1157 = vmatpush1.bf16.msra.mxu0 0
      %1158 = vmatprep.subr.bf16.mxu0 0
      %1159 = vmatpush1.bf16.msra.mxu0 0
      %1160 = vmatprep.subr.bf16.mxu0 0
      %1161 = vmatpush1.bf16.msra.mxu0 0
      %1162 = vmatprep.subr.bf16.mxu0 0
      %1163 = vmatpush1.bf16.msra.mxu0 0
      %1164 = vmatprep.subr.bf16.mxu0 0
      %1165 = vmatpush1.bf16.msra.mxu0 0
      %1166 = vmatprep.subr.bf16.mxu0 0
      %1167 = vmatpush1.bf16.msra.mxu0 0
      %1168 = vmatprep.subr.bf16.mxu0 0
      %1169 = vmatpush1.bf16.msra.mxu0 0
      %1170 = vmatprep.subr.bf16.mxu0 0
      %1171 = vmatpush1.bf16.msra.mxu0 0
      %1172 = vmatprep.subr.bf16.mxu0 0
      %1173 = vmatpush1.bf16.msra.mxu0 0
      %1174 = vmatprep.subr.bf16.mxu0 0
      %1175 = vmatpush1.bf16.msra.mxu0 0
      %1176 = vmatprep.subr.bf16.mxu0 0
      %1177 = vmatpush1.bf16.msra.mxu0 0
      %1178 = vmatprep.mubr.bf16.mxu0 0
      %1179 = vmatmul.mubr.bf16.gmra.mrb[0].mxu0 %v1099
      %v1180 = vpop.f32.mrb[0].mxu0
      %v1181 = vadd.f32 0.0, %v1180
      %v1182 = vpop.f32.mrb[0].mxu0
      %v1183 = vpop.f32.mrb[0].mxu0
      %v1184 = vadd.f32 0.0, %v1183
      %v1185 = vpop.f32.mrb[0].mxu0
      %1186 = vmatprep.mubr.bf16.mxu0 0
      %1187 = vmatmul.mubr.bf16.gmra.mrb[0].mxu0 %v1102
      %v1188 = vpop.f32.mrb[0].mxu0
      %v1189 = vadd.f32 0.0, %v1188
      %v1190 = vpop.f32.mrb[0].mxu0
      %v1191 = vpop.f32.mrb[0].mxu0
      %v1192 = vadd.f32 0.0, %v1191
      %v1193 = vpop.f32.mrb[0].mxu0
      %1194 = vmatprep.mubr.bf16.mxu0 0
      %1195 = vmatmul.mubr.bf16.gmra.mrb[0].mxu0 %v1099
      %v1196 = vpop.f32.mrb[0].mxu0
      %v1197 = vadd.f32 0.0, %v1196
      %v1198 = vpop.f32.mrb[0].mxu0
      %v1199 = vpop.f32.mrb[0].mxu0
      %v1200 = vadd.f32 0.0, %v1199
      %v1201 = vpop.f32.mrb[0].mxu0
      %1202 = vmatprep.mubr.bf16.mxu0 0
      %1203 = vmatmul.mubr.bf16.gmra.mrb[0].mxu0 %v1105
      %v1204 = vpop.f32.mrb[0].mxu0
      %v1205 = vadd.f32 0.0, %v1204
      %v1206 = vpop.f32.mrb[0].mxu0
      %v1207 = vpop.f32.mrb[0].mxu0
      %v1208 = vadd.f32 0.0, %v1207
      %v1209 = vpop.f32.mrb[0].mxu0
      %1210 = vmatprep.mubr.bf16.mxu0 0
      %1211 = vmatmul.mubr.bf16.gmra.mrb[0].mxu0 %v1108
      %v1212 = vpop.f32.mrb[0].mxu0
      %v1213 = vadd.f32 0.0, %v1212
      %v1214 = vpop.f32.mrb[0].mxu0
      %v1215 = vpop.f32.mrb[0].mxu0
      %v1216 = vadd.f32 0.0, %v1215
      %v1217 = vpop.f32.mrb[0].mxu0
      %1218 = vmatprep.mubr.bf16.mxu0 0
      %1219 = vmatmul.mubr.bf16.gmra.mrb[0].mxu0 %v1111
      %v1220 = vpop.f32.mrb[0].mxu0
      %v1221 = vadd.f32 0.0, %v1220
      %v1222 = vpop.f32.mrb[0].mxu0
      %v1223 = vpop.f32.mrb[0].mxu0
      %v1224 = vadd.f32 0.0, %v1223
      %v1225 = vpop.f32.mrb[0].mxu0
      %1226 = vmatprep.mubr.bf16.mxu0 0
      %1227 = vmatmul.mubr.bf16.gmra.mrb[0].mxu0 %v1114
      %v1228 = vpop.f32.mrb[0].mxu0
      %v1229 = vadd.f32 0.0, %v1228
      %v1230 = vpop.f32.mrb[0].mxu0
      %v1231 = vpop.f32.mrb[0].mxu0
      %v1232 = vadd.f32 0.0, %v1231
      %v1233 = vpop.f32.mrb[0].mxu0
      %1234 = vmatprep.mubr.bf16.mxu0 0
      %1235 = vmatmul.mubr.bf16.gmra.mrb[0].mxu0 %v1117
      %v1236 = vpop.f32.mrb[0].mxu0
      %v1237 = vadd.f32 0.0, %v1236
      %v1238 = vpop.f32.mrb[0].mxu0
      %v1239 = vpop.f32.mrb[0].mxu0
      %v1240 = vadd.f32 0.0, %v1239
      %v1241 = vpop.f32.mrb[0].mxu0
      %1242 = vmatprep.mubr.bf16.mxu0 0
      %1243 = vmatmul.mubr.bf16.gmra.mrb[0].mxu0 %v1120
      %v1244 = vpop.f32.mrb[0].mxu0
      %v1245 = vadd.f32 0.0, %v1244
      %v1246 = vpop.f32.mrb[0].mxu0
      %v1247 = vpop.f32.mrb[0].mxu0
      %v1248 = vadd.f32 0.0, %v1247
      %v1249 = vpop.f32.mrb[0].mxu0
      %1250 = vmatprep.mubr.bf16.mxu0 0
      %1251 = vmatmul.mubr.bf16.gmra.mrb[0].mxu0 %v1123
      %v1252 = vpop.f32.mrb[0].mxu0
      %v1253 = vadd.f32 0.0, %v1252
      %v1254 = vpop.f32.mrb[0].mxu0
      %v1255 = vpop.f32.mrb[0].mxu0
      %v1256 = vadd.f32 0.0, %v1255
      %v1257 = vpop.f32.mrb[0].mxu0
      %1258 = vmatprep.mubr.bf16.mxu0 0
      %1259 = vmatmul.mubr.bf16.gmra.mrb[0].mxu0 %v1126
      %v1260 = vpop.f32.mrb[0].mxu0
      %v1261 = vadd.f32 0.0, %v1260
      %v1262 = vpop.f32.mrb[0].mxu0
      %v1263 = vpop.f32.mrb[0].mxu0
      %v1264 = vadd.f32 0.0, %v1263
      %v1265 = vpop.f32.mrb[0].mxu0
      %1266 = vmatprep.mubr.bf16.mxu0 0
      %1267 = vmatmul.mubr.bf16.gmra.mrb[0].mxu0 %v1129
      %v1268 = vpop.f32.mrb[0].mxu0
      %v1269 = vadd.f32 0.0, %v1268
      %v1270 = vpop.f32.mrb[0].mxu0
      %v1271 = vpop.f32.mrb[0].mxu0
      %v1272 = vadd.f32 0.0, %v1271
      %v1273 = vpop.f32.mrb[0].mxu0
      %1274 = vmatprep.mubr.bf16.mxu0 0
      %1275 = vmatmul.mubr.bf16.gmra.mrb[0].mxu0 %v1132
      %v1276 = vpop.f32.mrb[0].mxu0
      %v1277 = vadd.f32 0.0, %v1276
      %v1278 = vpop.f32.mrb[0].mxu0
      %v1279 = vpop.f32.mrb[0].mxu0
      %v1280 = vadd.f32 0.0, %v1279
      %v1281 = vpop.f32.mrb[0].mxu0
      %1282 = vmatprep.mubr.bf16.mxu0 0
      %1283 = vmatmul.mubr.bf16.gmra.mrb[0].mxu0 %v1135
      %v1284 = vpop.f32.mrb[0].mxu0
      %v1285 = vadd.f32 0.0, %v1284
      %v1286 = vpop.f32.mrb[0].mxu0
      %v1287 = vpop.f32.mrb[0].mxu0
      %v1288 = vadd.f32 0.0, %v1287
      %v1289 = vpop.f32.mrb[0].mxu0
      %1290 = vmatprep.mubr.bf16.mxu0 0
      %1291 = vmatmul.mubr.bf16.gmra.mrb[0].mxu0 %v1138
      %v1292 = vpop.f32.mrb[0].mxu0
      %v1293 = vadd.f32 0.0, %v1292
      %v1294 = vpop.f32.mrb[0].mxu0
      %v1295 = vpop.f32.mrb[0].mxu0
      %v1296 = vadd.f32 0.0, %v1295
      %v1297 = vpop.f32.mrb[0].mxu0
      %1298 = vmatprep.mubr.bf16.mxu0 0
      %1299 = vmatmul.mubr.bf16.gmra.mrb[0].mxu0 %v1141
      %v1300 = vpop.f32.mrb[0].mxu0
      %v1301 = vadd.f32 0.0, %v1300
      %v1302 = vpop.f32.mrb[0].mxu0
      %v1303 = vpop.f32.mrb[0].mxu0
      %v1304 = vadd.f32 0.0, %v1303
      %v1305 = vpop.f32.mrb[0].mxu0
      %1306 = vdwg.mxu0
      %v1307 = vadd.f32 %v972, %v1181
      %v1308 = vadd.f32 %v975, %v1184
      %v1309 = vadd.f32 %v980, %v1189
      %v1310 = vadd.f32 %v983, %v1192
      %v1311 = vadd.f32 %v988, %v1197
      %v1312 = vadd.f32 %v991, %v1200
      %v1313 = vadd.f32 %v996, %v1205
      %v1314 = vadd.f32 %v999, %v1208
      %v1315 = vadd.f32 %v1004, %v1213
      %v1316 = vadd.f32 %v1007, %v1216
      %v1317 = vadd.f32 %v1012, %v1221
      %v1318 = vadd.f32 %v1015, %v1224
      %v1319 = vadd.f32 %v1020, %v1229
      %v1320 = vadd.f32 %v1023, %v1232
      %v1321 = vadd.f32 %v1028, %v1237
      %v1322 = vadd.f32 %v1031, %v1240
      %v1323 = vadd.f32 %v1036, %v1245
      %v1324 = vadd.f32 %v1039, %v1248
      %v1325 = vadd.f32 %v1044, %v1253
      %v1326 = vadd.f32 %v1047, %v1256
      %v1327 = vadd.f32 %v1052, %v1261
      %v1328 = vadd.f32 %v1055, %v1264
      %v1329 = vadd.f32 %v1060, %v1269
      %v1330 = vadd.f32 %v1063, %v1272
      %v1331 = vadd.f32 %v1068, %v1277
      %v1332 = vadd.f32 %v1071, %v1280
      %v1333 = vadd.f32 %v1076, %v1285
      %v1334 = vadd.f32 %v1079, %v1288
      %v1335 = vadd.f32 %v1084, %v1293
      %v1336 = vadd.f32 %v1087, %v1296
      %v1337 = vadd.f32 %v1092, %v1301
      %v1338 = vadd.f32 %v1095, %v1304
      %v1340 = vsel %vm693, %v529, 0
      %v1343 = vsel %vm724, %v217, 0
      %1345 = vmatprep.subr.bf16.mxu0 0
      %1346 = vmatpush1.bf16.msra.mxu0 %v1343
      %1347 = vmatprep.subr.bf16.mxu0 0
      %1348 = vmatpush1.bf16.msra.mxu0 0
      %1349 = vmatprep.subr.bf16.mxu0 0
      %1350 = vmatpush1.bf16.msra.mxu0 0
      %1351 = vmatprep.subr.bf16.mxu0 0
      %1352 = vmatpush1.bf16.msra.mxu0 0
      %1353 = vmatprep.subr.bf16.mxu0 0
      %1354 = vmatpush1.bf16.msra.mxu0 0
      %1355 = vmatprep.subr.bf16.mxu0 0
      %1356 = vmatpush1.bf16.msra.mxu0 0
      %1357 = vmatprep.subr.bf16.mxu0 0
      %1358 = vmatpush1.bf16.msra.mxu0 0
      %1359 = vmatprep.subr.bf16.mxu0 0
      %1360 = vmatpush1.bf16.msra.mxu0 0
      %1361 = vmatprep.subr.bf16.mxu0 0
      %1362 = vmatpush1.bf16.msra.mxu0 0
      %1363 = vmatprep.subr.bf16.mxu0 0
      %1364 = vmatpush1.bf16.msra.mxu0 0
      %1365 = vmatprep.subr.bf16.mxu0 0
      %1366 = vmatpush1.bf16.msra.mxu0 0
      %1367 = vmatprep.subr.bf16.mxu0 0
      %1368 = vmatpush1.bf16.msra.mxu0 0
      %1369 = vmatprep.subr.bf16.mxu0 0
      %1370 = vmatpush1.bf16.msra.mxu0 0
      %1371 = vmatprep.subr.bf16.mxu0 0
      %1372 = vmatpush1.bf16.msra.mxu0 0
      %1373 = vmatprep.subr.bf16.mxu0 0
      %1374 = vmatpush1.bf16.msra.mxu0 0
      %1375 = vmatprep.subr.bf16.mxu0 0
      %1376 = vmatpush1.bf16.msra.mxu0 0
      %1377 = vmatprep.mubr.bf16.mxu0 0
      %1378 = vmatmul.mubr.bf16.gmra.mrb[0].mxu0 %v893
      %v1379 = vpop.f32.mrb[0].mxu0
      %v1380 = vadd.f32 0.0, %v1379
      %v1381 = vpop.f32.mrb[0].mxu0
      %v1382 = vpop.f32.mrb[0].mxu0
      %v1383 = vadd.f32 0.0, %v1382
      %v1384 = vpop.f32.mrb[0].mxu0
      %1385 = vmatprep.mubr.bf16.mxu0 0
      %1386 = vmatmul.mubr.bf16.gmra.mrb[0].mxu0 %v890
      %v1387 = vpop.f32.mrb[0].mxu0
      %v1388 = vadd.f32 0.0, %v1387
      %v1389 = vpop.f32.mrb[0].mxu0
      %v1390 = vpop.f32.mrb[0].mxu0
      %v1391 = vadd.f32 0.0, %v1390
      %v1392 = vpop.f32.mrb[0].mxu0
      %1393 = vmatprep.mubr.bf16.mxu0 0
      %1394 = vmatmul.mubr.bf16.gmra.mrb[0].mxu0 %v896
      %v1395 = vpop.f32.mrb[0].mxu0
      %v1396 = vadd.f32 0.0, %v1395
      %v1397 = vpop.f32.mrb[0].mxu0
      %v1398 = vpop.f32.mrb[0].mxu0
      %v1399 = vadd.f32 0.0, %v1398
      %v1400 = vpop.f32.mrb[0].mxu0
      %1401 = vmatprep.mubr.bf16.mxu0 0
      %1402 = vmatmul.mubr.bf16.gmra.mrb[0].mxu0 %v899
      %v1403 = vpop.f32.mrb[0].mxu0
      %v1404 = vadd.f32 0.0, %v1403
      %v1405 = vpop.f32.mrb[0].mxu0
      %v1406 = vpop.f32.mrb[0].mxu0
      %v1407 = vadd.f32 0.0, %v1406
      %v1408 = vpop.f32.mrb[0].mxu0
      %1409 = vmatprep.mubr.bf16.mxu0 0
      %1410 = vmatmul.mubr.bf16.gmra.mrb[0].mxu0 %v902
      %v1411 = vpop.f32.mrb[0].mxu0
      %v1412 = vadd.f32 0.0, %v1411
      %v1413 = vpop.f32.mrb[0].mxu0
      %v1414 = vpop.f32.mrb[0].mxu0
      %v1415 = vadd.f32 0.0, %v1414
      %v1416 = vpop.f32.mrb[0].mxu0
      %1417 = vmatprep.mubr.bf16.mxu0 0
      %1418 = vmatmul.mubr.bf16.gmra.mrb[0].mxu0 %v905
      %v1419 = vpop.f32.mrb[0].mxu0
      %v1420 = vadd.f32 0.0, %v1419
      %v1421 = vpop.f32.mrb[0].mxu0
      %v1422 = vpop.f32.mrb[0].mxu0
      %v1423 = vadd.f32 0.0, %v1422
      %v1424 = vpop.f32.mrb[0].mxu0
      %1425 = vmatprep.mubr.bf16.mxu0 0
      %1426 = vmatmul.mubr.bf16.gmra.mrb[0].mxu0 %v908
      %v1427 = vpop.f32.mrb[0].mxu0
      %v1428 = vadd.f32 0.0, %v1427
      %v1429 = vpop.f32.mrb[0].mxu0
      %v1430 = vpop.f32.mrb[0].mxu0
      %v1431 = vadd.f32 0.0, %v1430
      %v1432 = vpop.f32.mrb[0].mxu0
      %1433 = vmatprep.mubr.bf16.mxu0 0
      %1434 = vmatmul.mubr.bf16.gmra.mrb[0].mxu0 %v911
      %v1435 = vpop.f32.mrb[0].mxu0
      %v1436 = vadd.f32 0.0, %v1435
      %v1437 = vpop.f32.mrb[0].mxu0
      %v1438 = vpop.f32.mrb[0].mxu0
      %v1439 = vadd.f32 0.0, %v1438
      %v1440 = vpop.f32.mrb[0].mxu0
      %1441 = vmatprep.mubr.bf16.mxu0 0
      %1442 = vmatmul.mubr.bf16.gmra.mrb[0].mxu0 %v914
      %v1443 = vpop.f32.mrb[0].mxu0
      %v1444 = vadd.f32 0.0, %v1443
      %v1445 = vpop.f32.mrb[0].mxu0
      %v1446 = vpop.f32.mrb[0].mxu0
      %v1447 = vadd.f32 0.0, %v1446
      %v1448 = vpop.f32.mrb[0].mxu0
      %1449 = vmatprep.mubr.bf16.mxu0 0
      %1450 = vmatmul.mubr.bf16.gmra.mrb[0].mxu0 %v917
      %v1451 = vpop.f32.mrb[0].mxu0
      %v1452 = vadd.f32 0.0, %v1451
      %v1453 = vpop.f32.mrb[0].mxu0
      %v1454 = vpop.f32.mrb[0].mxu0
      %v1455 = vadd.f32 0.0, %v1454
      %v1456 = vpop.f32.mrb[0].mxu0
      %1457 = vmatprep.mubr.bf16.mxu0 0
      %1458 = vmatmul.mubr.bf16.gmra.mrb[0].mxu0 %v920
      %v1459 = vpop.f32.mrb[0].mxu0
      %v1460 = vadd.f32 0.0, %v1459
      %v1461 = vpop.f32.mrb[0].mxu0
      %v1462 = vpop.f32.mrb[0].mxu0
      %v1463 = vadd.f32 0.0, %v1462
      %v1464 = vpop.f32.mrb[0].mxu0
      %1465 = vmatprep.mubr.bf16.mxu0 0
      %1466 = vmatmul.mubr.bf16.gmra.mrb[0].mxu0 %v923
      %v1467 = vpop.f32.mrb[0].mxu0
      %v1468 = vadd.f32 0.0, %v1467
      %v1469 = vpop.f32.mrb[0].mxu0
      %v1470 = vpop.f32.mrb[0].mxu0
      %v1471 = vadd.f32 0.0, %v1470
      %v1472 = vpop.f32.mrb[0].mxu0
      %1473 = vmatprep.mubr.bf16.mxu0 0
      %1474 = vmatmul.mubr.bf16.gmra.mrb[0].mxu0 %v926
      %v1475 = vpop.f32.mrb[0].mxu0
      %v1476 = vadd.f32 0.0, %v1475
      %v1477 = vpop.f32.mrb[0].mxu0
      %v1478 = vpop.f32.mrb[0].mxu0
      %v1479 = vadd.f32 0.0, %v1478
      %v1480 = vpop.f32.mrb[0].mxu0
      %1481 = vmatprep.mubr.bf16.mxu0 0
      %1482 = vmatmul.mubr.bf16.gmra.mrb[0].mxu0 %v929
      %v1483 = vpop.f32.mrb[0].mxu0
      %v1484 = vadd.f32 0.0, %v1483
      %v1485 = vpop.f32.mrb[0].mxu0
      %v1486 = vpop.f32.mrb[0].mxu0
      %v1487 = vadd.f32 0.0, %v1486
      %v1488 = vpop.f32.mrb[0].mxu0
      %1489 = vmatprep.mubr.bf16.mxu0 0
      %1490 = vmatmul.mubr.bf16.gmra.mrb[0].mxu0 %v932
      %v1491 = vpop.f32.mrb[0].mxu0
      %v1492 = vadd.f32 0.0, %v1491
      %v1493 = vpop.f32.mrb[0].mxu0
      %v1494 = vpop.f32.mrb[0].mxu0
      %v1495 = vadd.f32 0.0, %v1494
      %v1496 = vpop.f32.mrb[0].mxu0
      %1497 = vmatprep.mubr.bf16.mxu0 0
      %1498 = vmatmul.mubr.bf16.gmra.mrb[0].mxu0 %v1340
      %v1499 = vpop.f32.mrb[0].mxu0
      %v1500 = vadd.f32 0.0, %v1499
      %v1501 = vpop.f32.mrb[0].mxu0
      %v1502 = vpop.f32.mrb[0].mxu0
      %v1503 = vadd.f32 0.0, %v1502
      %v1504 = vpop.f32.mrb[0].mxu0
      %1505 = vdwg.mxu0
      %v1506 = vadd.f32 %v1307, %v1380
      %v1507 = vadd.f32 %v1308, %v1383
      %v1508 = vadd.f32 %v1309, %v1388
      %v1509 = vadd.f32 %v1310, %v1391
      %v1510 = vadd.f32 %v1311, %v1396
      %v1511 = vadd.f32 %v1312, %v1399
      %v1512 = vadd.f32 %v1313, %v1404
      %v1513 = vadd.f32 %v1314, %v1407
      %v1514 = vadd.f32 %v1315, %v1412
      %v1515 = vadd.f32 %v1316, %v1415
      %v1516 = vadd.f32 %v1317, %v1420
      %v1517 = vadd.f32 %v1318, %v1423
      %v1518 = vadd.f32 %v1319, %v1428
      %v1519 = vadd.f32 %v1320, %v1431
      %v1520 = vadd.f32 %v1321, %v1436
      %v1521 = vadd.f32 %v1322, %v1439
      %v1522 = vadd.f32 %v1323, %v1444
      %v1523 = vadd.f32 %v1324, %v1447
      %v1524 = vadd.f32 %v1325, %v1452
      %v1525 = vadd.f32 %v1326, %v1455
      %v1526 = vadd.f32 %v1327, %v1460
      %v1527 = vadd.f32 %v1328, %v1463
      %v1528 = vadd.f32 %v1329, %v1468
      %v1529 = vadd.f32 %v1330, %v1471
      %v1530 = vadd.f32 %v1331, %v1476
      %v1531 = vadd.f32 %v1332, %v1479
      %v1532 = vadd.f32 %v1333, %v1484
      %v1533 = vadd.f32 %v1334, %v1487
      %v1534 = vadd.f32 %v1335, %v1492
      %v1535 = vadd.f32 %v1336, %v1495
      %v1536 = vadd.f32 %v1337, %v1500
      %v1537 = vadd.f32 %v1338, %v1503
      %v1538 = vsel %vm693, %v382, 0
      %v1541 = vsel %vm724, %v218, 0
      %1543 = vmatprep.subr.bf16.mxu0 0
      %1544 = vmatpush1.bf16.msra.mxu0 %v1541
      %1545 = vmatprep.subr.bf16.mxu0 0
      %1546 = vmatpush1.bf16.msra.mxu0 0
      %1547 = vmatprep.subr.bf16.mxu0 0
      %1548 = vmatpush1.bf16.msra.mxu0 0
      %1549 = vmatprep.subr.bf16.mxu0 0
      %1550 = vmatpush1.bf16.msra.mxu0 0
      %1551 = vmatprep.subr.bf16.mxu0 0
      %1552 = vmatpush1.bf16.msra.mxu0 0
      %1553 = vmatprep.subr.bf16.mxu0 0
      %1554 = vmatpush1.bf16.msra.mxu0 0
      %1555 = vmatprep.subr.bf16.mxu0 0
      %1556 = vmatpush1.bf16.msra.mxu0 0
      %1557 = vmatprep.subr.bf16.mxu0 0
      %1558 = vmatpush1.bf16.msra.mxu0 0
      %1559 = vmatprep.subr.bf16.mxu0 0
      %1560 = vmatpush1.bf16.msra.mxu0 0
      %1561 = vmatprep.subr.bf16.mxu0 0
      %1562 = vmatpush1.bf16.msra.mxu0 0
      %1563 = vmatprep.subr.bf16.mxu0 0
      %1564 = vmatpush1.bf16.msra.mxu0 0
      %1565 = vmatprep.subr.bf16.mxu0 0
      %1566 = vmatpush1.bf16.msra.mxu0 0
      %1567 = vmatprep.subr.bf16.mxu0 0
      %1568 = vmatpush1.bf16.msra.mxu0 0
      %1569 = vmatprep.subr.bf16.mxu0 0
      %1570 = vmatpush1.bf16.msra.mxu0 0
      %1571 = vmatprep.subr.bf16.mxu0 0
      %1572 = vmatpush1.bf16.msra.mxu0 0
      %1573 = vmatprep.subr.bf16.mxu0 0
      %1574 = vmatpush1.bf16.msra.mxu0 0
      %1575 = vmatprep.mubr.bf16.mxu0 0
      %1576 = vmatmul.mubr.bf16.gmra.mrb[0].mxu0 %v696
      %v1577 = vpop.f32.mrb[0].mxu0
      %v1578 = vadd.f32 0.0, %v1577
      %v1579 = vpop.f32.mrb[0].mxu0
      %v1580 = vpop.f32.mrb[0].mxu0
      %v1581 = vadd.f32 0.0, %v1580
      %v1582 = vpop.f32.mrb[0].mxu0
      %1583 = vmatprep.mubr.bf16.mxu0 0
      %1584 = vmatmul.mubr.bf16.gmra.mrb[0].mxu0 %v694
      %v1585 = vpop.f32.mrb[0].mxu0
      %v1586 = vadd.f32 0.0, %v1585
      %v1587 = vpop.f32.mrb[0].mxu0
      %v1588 = vpop.f32.mrb[0].mxu0
      %v1589 = vadd.f32 0.0, %v1588
      %v1590 = vpop.f32.mrb[0].mxu0
      %1591 = vmatprep.mubr.bf16.mxu0 0
      %1592 = vmatmul.mubr.bf16.gmra.mrb[0].mxu0 %v698
      %v1593 = vpop.f32.mrb[0].mxu0
      %v1594 = vadd.f32 0.0, %v1593
      %v1595 = vpop.f32.mrb[0].mxu0
      %v1596 = vpop.f32.mrb[0].mxu0
      %v1597 = vadd.f32 0.0, %v1596
      %v1598 = vpop.f32.mrb[0].mxu0
      %1599 = vmatprep.mubr.bf16.mxu0 0
      %1600 = vmatmul.mubr.bf16.gmra.mrb[0].mxu0 %v700
      %v1601 = vpop.f32.mrb[0].mxu0
      %v1602 = vadd.f32 0.0, %v1601
      %v1603 = vpop.f32.mrb[0].mxu0
      %v1604 = vpop.f32.mrb[0].mxu0
      %v1605 = vadd.f32 0.0, %v1604
      %v1606 = vpop.f32.mrb[0].mxu0
      %1607 = vmatprep.mubr.bf16.mxu0 0
      %1608 = vmatmul.mubr.bf16.gmra.mrb[0].mxu0 %v702
      %v1609 = vpop.f32.mrb[0].mxu0
      %v1610 = vadd.f32 0.0, %v1609
      %v1611 = vpop.f32.mrb[0].mxu0
      %v1612 = vpop.f32.mrb[0].mxu0
      %v1613 = vadd.f32 0.0, %v1612
      %v1614 = vpop.f32.mrb[0].mxu0
      %1615 = vmatprep.mubr.bf16.mxu0 0
      %1616 = vmatmul.mubr.bf16.gmra.mrb[0].mxu0 %v704
      %v1617 = vpop.f32.mrb[0].mxu0
      %v1618 = vadd.f32 0.0, %v1617
      %v1619 = vpop.f32.mrb[0].mxu0
      %v1620 = vpop.f32.mrb[0].mxu0
      %v1621 = vadd.f32 0.0, %v1620
      %v1622 = vpop.f32.mrb[0].mxu0
      %1623 = vmatprep.mubr.bf16.mxu0 0
      %1624 = vmatmul.mubr.bf16.gmra.mrb[0].mxu0 %v706
      %v1625 = vpop.f32.mrb[0].mxu0
      %v1626 = vadd.f32 0.0, %v1625
      %v1627 = vpop.f32.mrb[0].mxu0
      %v1628 = vpop.f32.mrb[0].mxu0
      %v1629 = vadd.f32 0.0, %v1628
      %v1630 = vpop.f32.mrb[0].mxu0
      %1631 = vmatprep.mubr.bf16.mxu0 0
      %1632 = vmatmul.mubr.bf16.gmra.mrb[0].mxu0 %v708
      %v1633 = vpop.f32.mrb[0].mxu0
      %v1634 = vadd.f32 0.0, %v1633
      %v1635 = vpop.f32.mrb[0].mxu0
      %v1636 = vpop.f32.mrb[0].mxu0
      %v1637 = vadd.f32 0.0, %v1636
      %v1638 = vpop.f32.mrb[0].mxu0
      %1639 = vmatprep.mubr.bf16.mxu0 0
      %1640 = vmatmul.mubr.bf16.gmra.mrb[0].mxu0 %v710
      %v1641 = vpop.f32.mrb[0].mxu0
      %v1642 = vadd.f32 0.0, %v1641
      %v1643 = vpop.f32.mrb[0].mxu0
      %v1644 = vpop.f32.mrb[0].mxu0
      %v1645 = vadd.f32 0.0, %v1644
      %v1646 = vpop.f32.mrb[0].mxu0
      %1647 = vmatprep.mubr.bf16.mxu0 0
      %1648 = vmatmul.mubr.bf16.gmra.mrb[0].mxu0 %v712
      %v1649 = vpop.f32.mrb[0].mxu0
      %v1650 = vadd.f32 0.0, %v1649
      %v1651 = vpop.f32.mrb[0].mxu0
      %v1652 = vpop.f32.mrb[0].mxu0
      %v1653 = vadd.f32 0.0, %v1652
      %v1654 = vpop.f32.mrb[0].mxu0
      %1655 = vmatprep.mubr.bf16.mxu0 0
      %1656 = vmatmul.mubr.bf16.gmra.mrb[0].mxu0 %v714
      %v1657 = vpop.f32.mrb[0].mxu0
      %v1658 = vadd.f32 0.0, %v1657
      %v1659 = vpop.f32.mrb[0].mxu0
      %v1660 = vpop.f32.mrb[0].mxu0
      %v1661 = vadd.f32 0.0, %v1660
      %v1662 = vpop.f32.mrb[0].mxu0
      %1663 = vmatprep.mubr.bf16.mxu0 0
      %1664 = vmatmul.mubr.bf16.gmra.mrb[0].mxu0 %v716
      %v1665 = vpop.f32.mrb[0].mxu0
      %v1666 = vadd.f32 0.0, %v1665
      %v1667 = vpop.f32.mrb[0].mxu0
      %v1668 = vpop.f32.mrb[0].mxu0
      %v1669 = vadd.f32 0.0, %v1668
      %v1670 = vpop.f32.mrb[0].mxu0
      %1671 = vmatprep.mubr.bf16.mxu0 0
      %1672 = vmatmul.mubr.bf16.gmra.mrb[0].mxu0 %v718
      %v1673 = vpop.f32.mrb[0].mxu0
      %v1674 = vadd.f32 0.0, %v1673
      %v1675 = vpop.f32.mrb[0].mxu0
      %v1676 = vpop.f32.mrb[0].mxu0
      %v1677 = vadd.f32 0.0, %v1676
      %v1678 = vpop.f32.mrb[0].mxu0
      %1679 = vmatprep.mubr.bf16.mxu0 0
      %1680 = vmatmul.mubr.bf16.gmra.mrb[0].mxu0 %v720
      %v1681 = vpop.f32.mrb[0].mxu0
      %v1682 = vadd.f32 0.0, %v1681
      %v1683 = vpop.f32.mrb[0].mxu0
      %v1684 = vpop.f32.mrb[0].mxu0
      %v1685 = vadd.f32 0.0, %v1684
      %v1686 = vpop.f32.mrb[0].mxu0
      %1687 = vmatprep.mubr.bf16.mxu0 0
      %1688 = vmatmul.mubr.bf16.gmra.mrb[0].mxu0 %v722
      %v1689 = vpop.f32.mrb[0].mxu0
      %v1690 = vadd.f32 0.0, %v1689
      %v1691 = vpop.f32.mrb[0].mxu0
      %v1692 = vpop.f32.mrb[0].mxu0
      %v1693 = vadd.f32 0.0, %v1692
      %v1694 = vpop.f32.mrb[0].mxu0
      %1695 = vmatprep.mubr.bf16.mxu0 0
      %1696 = vmatmul.mubr.bf16.gmra.mrb[0].mxu0 %v1538
      %v1697 = vpop.f32.mrb[0].mxu0
      %v1698 = vadd.f32 0.0, %v1697
      %v1699 = vpop.f32.mrb[0].mxu0
      %v1700 = vpop.f32.mrb[0].mxu0
      %v1701 = vadd.f32 0.0, %v1700
      %v1702 = vpop.f32.mrb[0].mxu0
      %1703 = vdwg.mxu0
      %v1704 = vadd.f32 %v1506, %v1578
      %v1705 = vadd.f32 %v1507, %v1581
      %v1706 = vadd.f32 %v1508, %v1586
      %v1707 = vadd.f32 %v1509, %v1589
      %v1708 = vadd.f32 %v1510, %v1594
      %v1709 = vadd.f32 %v1511, %v1597
      %v1710 = vadd.f32 %v1512, %v1602
      %v1711 = vadd.f32 %v1513, %v1605
      %v1712 = vadd.f32 %v1514, %v1610
      %v1713 = vadd.f32 %v1515, %v1613
      %v1714 = vadd.f32 %v1516, %v1618
      %v1715 = vadd.f32 %v1517, %v1621
      %v1716 = vadd.f32 %v1518, %v1626
      %v1717 = vadd.f32 %v1519, %v1629
      %v1718 = vadd.f32 %v1520, %v1634
      %v1719 = vadd.f32 %v1521, %v1637
      %v1720 = vadd.f32 %v1522, %v1642
      %v1721 = vadd.f32 %v1523, %v1645
      %v1722 = vadd.f32 %v1524, %v1650
      %v1723 = vadd.f32 %v1525, %v1653
      %v1724 = vadd.f32 %v1526, %v1658
      %v1725 = vadd.f32 %v1527, %v1661
      %v1726 = vadd.f32 %v1528, %v1666
      %v1727 = vadd.f32 %v1529, %v1669
      %v1728 = vadd.f32 %v1530, %v1674
      %v1729 = vadd.f32 %v1531, %v1677
      %v1730 = vadd.f32 %v1532, %v1682
      %v1731 = vadd.f32 %v1533, %v1685
      %v1732 = vadd.f32 %v1534, %v1690
      %v1733 = vadd.f32 %v1535, %v1693
      %v1734 = vadd.f32 %v1536, %v1698
      %v1735 = vadd.f32 %v1537, %v1701
      %v1737 = vsel %vm693, %v692, 0
      %v1740 = vsel %vm724, %v219, 0
      %1742 = vmatprep.subr.bf16.mxu0 0
      %1743 = vmatpush1.bf16.msra.mxu0 %v1740
      %1744 = vmatprep.subr.bf16.mxu0 0
      %1745 = vmatpush1.bf16.msra.mxu0 0
      %1746 = vmatprep.subr.bf16.mxu0 0
      %1747 = vmatpush1.bf16.msra.mxu0 0
      %1748 = vmatprep.subr.bf16.mxu0 0
      %1749 = vmatpush1.bf16.msra.mxu0 0
      %1750 = vmatprep.subr.bf16.mxu0 0
      %1751 = vmatpush1.bf16.msra.mxu0 0
      %1752 = vmatprep.subr.bf16.mxu0 0
      %1753 = vmatpush1.bf16.msra.mxu0 0
      %1754 = vmatprep.subr.bf16.mxu0 0
      %1755 = vmatpush1.bf16.msra.mxu0 0
      %1756 = vmatprep.subr.bf16.mxu0 0
      %1757 = vmatpush1.bf16.msra.mxu0 0
      %1758 = vmatprep.subr.bf16.mxu0 0
      %1759 = vmatpush1.bf16.msra.mxu0 0
      %1760 = vmatprep.subr.bf16.mxu0 0
      %1761 = vmatpush1.bf16.msra.mxu0 0
      %1762 = vmatprep.subr.bf16.mxu0 0
      %1763 = vmatpush1.bf16.msra.mxu0 0
      %1764 = vmatprep.subr.bf16.mxu0 0
      %1765 = vmatpush1.bf16.msra.mxu0 0
      %1766 = vmatprep.subr.bf16.mxu0 0
      %1767 = vmatpush1.bf16.msra.mxu0 0
      %1768 = vmatprep.subr.bf16.mxu0 0
      %1769 = vmatpush1.bf16.msra.mxu0 0
      %1770 = vmatprep.subr.bf16.mxu0 0
      %1771 = vmatpush1.bf16.msra.mxu0 0
      %1772 = vmatprep.subr.bf16.mxu0 0
      %1773 = vmatpush1.bf16.msra.mxu0 0
      %1774 = vmatprep.mubr.bf16.mxu0 0
      %1775 = vmatmul.mubr.bf16.gmra.mrb[0].mxu0 %v1102
      %v1776 = vpop.f32.mrb[0].mxu0
      %v1777 = vadd.f32 0.0, %v1776
      %v1778 = vpop.f32.mrb[0].mxu0
      %v1779 = vpop.f32.mrb[0].mxu0
      %v1780 = vadd.f32 0.0, %v1779
      %v1781 = vpop.f32.mrb[0].mxu0
      %1782 = vmatprep.mubr.bf16.mxu0 0
      %1783 = vmatmul.mubr.bf16.gmra.mrb[0].mxu0 %v1099
      %v1784 = vpop.f32.mrb[0].mxu0
      %v1785 = vadd.f32 0.0, %v1784
      %v1786 = vpop.f32.mrb[0].mxu0
      %v1787 = vpop.f32.mrb[0].mxu0
      %v1788 = vadd.f32 0.0, %v1787
      %v1789 = vpop.f32.mrb[0].mxu0
      %1790 = vmatprep.mubr.bf16.mxu0 0
      %1791 = vmatmul.mubr.bf16.gmra.mrb[0].mxu0 %v1105
      %v1792 = vpop.f32.mrb[0].mxu0
      %v1793 = vadd.f32 0.0, %v1792
      %v1794 = vpop.f32.mrb[0].mxu0
      %v1795 = vpop.f32.mrb[0].mxu0
      %v1796 = vadd.f32 0.0, %v1795
      %v1797 = vpop.f32.mrb[0].mxu0
      %1798 = vmatprep.mubr.bf16.mxu0 0
      %1799 = vmatmul.mubr.bf16.gmra.mrb[0].mxu0 %v1108
      %v1800 = vpop.f32.mrb[0].mxu0
      %v1801 = vadd.f32 0.0, %v1800
      %v1802 = vpop.f32.mrb[0].mxu0
      %v1803 = vpop.f32.mrb[0].mxu0
      %v1804 = vadd.f32 0.0, %v1803
      %v1805 = vpop.f32.mrb[0].mxu0
      %1806 = vmatprep.mubr.bf16.mxu0 0
      %1807 = vmatmul.mubr.bf16.gmra.mrb[0].mxu0 %v1111
      %v1808 = vpop.f32.mrb[0].mxu0
      %v1809 = vadd.f32 0.0, %v1808
      %v1810 = vpop.f32.mrb[0].mxu0
      %v1811 = vpop.f32.mrb[0].mxu0
      %v1812 = vadd.f32 0.0, %v1811
      %v1813 = vpop.f32.mrb[0].mxu0
      %1814 = vmatprep.mubr.bf16.mxu0 0
      %1815 = vmatmul.mubr.bf16.gmra.mrb[0].mxu0 %v1114
      %v1816 = vpop.f32.mrb[0].mxu0
      %v1817 = vadd.f32 0.0, %v1816
      %v1818 = vpop.f32.mrb[0].mxu0
      %v1819 = vpop.f32.mrb[0].mxu0
      %v1820 = vadd.f32 0.0, %v1819
      %v1821 = vpop.f32.mrb[0].mxu0
      %1822 = vmatprep.mubr.bf16.mxu0 0
      %1823 = vmatmul.mubr.bf16.gmra.mrb[0].mxu0 %v1117
      %v1824 = vpop.f32.mrb[0].mxu0
      %v1825 = vadd.f32 0.0, %v1824
      %v1826 = vpop.f32.mrb[0].mxu0
      %v1827 = vpop.f32.mrb[0].mxu0
      %v1828 = vadd.f32 0.0, %v1827
      %v1829 = vpop.f32.mrb[0].mxu0
      %1830 = vmatprep.mubr.bf16.mxu0 0
      %1831 = vmatmul.mubr.bf16.gmra.mrb[0].mxu0 %v1120
      %v1832 = vpop.f32.mrb[0].mxu0
      %v1833 = vadd.f32 0.0, %v1832
      %v1834 = vpop.f32.mrb[0].mxu0
      %v1835 = vpop.f32.mrb[0].mxu0
      %v1836 = vadd.f32 0.0, %v1835
      %v1837 = vpop.f32.mrb[0].mxu0
      %1838 = vmatprep.mubr.bf16.mxu0 0
      %1839 = vmatmul.mubr.bf16.gmra.mrb[0].mxu0 %v1123
      %v1840 = vpop.f32.mrb[0].mxu0
      %v1841 = vadd.f32 0.0, %v1840
      %v1842 = vpop.f32.mrb[0].mxu0
      %v1843 = vpop.f32.mrb[0].mxu0
      %v1844 = vadd.f32 0.0, %v1843
      %v1845 = vpop.f32.mrb[0].mxu0
      %1846 = vmatprep.mubr.bf16.mxu0 0
      %1847 = vmatmul.mubr.bf16.gmra.mrb[0].mxu0 %v1126
      %v1848 = vpop.f32.mrb[0].mxu0
      %v1849 = vadd.f32 0.0, %v1848
      %v1850 = vpop.f32.mrb[0].mxu0
      %v1851 = vpop.f32.mrb[0].mxu0
      %v1852 = vadd.f32 0.0, %v1851
      %v1853 = vpop.f32.mrb[0].mxu0
      %1854 = vmatprep.mubr.bf16.mxu0 0
      %1855 = vmatmul.mubr.bf16.gmra.mrb[0].mxu0 %v1129
      %v1856 = vpop.f32.mrb[0].mxu0
      %v1857 = vadd.f32 0.0, %v1856
      %v1858 = vpop.f32.mrb[0].mxu0
      %v1859 = vpop.f32.mrb[0].mxu0
      %v1860 = vadd.f32 0.0, %v1859
      %v1861 = vpop.f32.mrb[0].mxu0
      %1862 = vmatprep.mubr.bf16.mxu0 0
      %1863 = vmatmul.mubr.bf16.gmra.mrb[0].mxu0 %v1132
      %v1864 = vpop.f32.mrb[0].mxu0
      %v1865 = vadd.f32 0.0, %v1864
      %v1866 = vpop.f32.mrb[0].mxu0
      %v1867 = vpop.f32.mrb[0].mxu0
      %v1868 = vadd.f32 0.0, %v1867
      %v1869 = vpop.f32.mrb[0].mxu0
      %1870 = vmatprep.mubr.bf16.mxu0 0
      %1871 = vmatmul.mubr.bf16.gmra.mrb[0].mxu0 %v1135
      %v1872 = vpop.f32.mrb[0].mxu0
      %v1873 = vadd.f32 0.0, %v1872
      %v1874 = vpop.f32.mrb[0].mxu0
      %v1875 = vpop.f32.mrb[0].mxu0
      %v1876 = vadd.f32 0.0, %v1875
      %v1877 = vpop.f32.mrb[0].mxu0
      %1878 = vmatprep.mubr.bf16.mxu0 0
      %1879 = vmatmul.mubr.bf16.gmra.mrb[0].mxu0 %v1138
      %v1880 = vpop.f32.mrb[0].mxu0
      %v1881 = vadd.f32 0.0, %v1880
      %v1882 = vpop.f32.mrb[0].mxu0
      %v1883 = vpop.f32.mrb[0].mxu0
      %v1884 = vadd.f32 0.0, %v1883
      %v1885 = vpop.f32.mrb[0].mxu0
      %1886 = vmatprep.mubr.bf16.mxu0 0
      %1887 = vmatmul.mubr.bf16.gmra.mrb[0].mxu0 %v1141
      %v1888 = vpop.f32.mrb[0].mxu0
      %v1889 = vadd.f32 0.0, %v1888
      %v1890 = vpop.f32.mrb[0].mxu0
      %v1891 = vpop.f32.mrb[0].mxu0
      %v1892 = vadd.f32 0.0, %v1891
      %v1893 = vpop.f32.mrb[0].mxu0
      %1894 = vmatprep.mubr.bf16.mxu0 0
      %1895 = vmatmul.mubr.bf16.gmra.mrb[0].mxu0 %v1737
      %v1896 = vpop.f32.mrb[0].mxu0
      %v1897 = vadd.f32 0.0, %v1896
      %v1898 = vpop.f32.mrb[0].mxu0
      %v1899 = vpop.f32.mrb[0].mxu0
      %v1900 = vadd.f32 0.0, %v1899
      %v1901 = vpop.f32.mrb[0].mxu0
      %1902 = vdwg.mxu0
      %v1903 = vadd.f32 %v1704, %v1777
      %v1904 = vadd.f32 %v1705, %v1780
      %v1905 = vadd.f32 %v1706, %v1785
      %v1906 = vadd.f32 %v1707, %v1788
      %v1907 = vadd.f32 %v1708, %v1793
      %v1908 = vadd.f32 %v1709, %v1796
      %v1909 = vadd.f32 %v1710, %v1801
      %v1910 = vadd.f32 %v1711, %v1804
      %v1911 = vadd.f32 %v1712, %v1809
      %v1912 = vadd.f32 %v1713, %v1812
      %v1913 = vadd.f32 %v1714, %v1817
      %v1914 = vadd.f32 %v1715, %v1820
      %v1915 = vadd.f32 %v1716, %v1825
      %v1916 = vadd.f32 %v1717, %v1828
      %v1917 = vadd.f32 %v1718, %v1833
      %v1918 = vadd.f32 %v1719, %v1836
      %v1919 = vadd.f32 %v1720, %v1841
      %v1920 = vadd.f32 %v1721, %v1844
      %v1921 = vadd.f32 %v1722, %v1849
      %v1922 = vadd.f32 %v1723, %v1852
      %v1923 = vadd.f32 %v1724, %v1857
      %v1924 = vadd.f32 %v1725, %v1860
      %v1925 = vadd.f32 %v1726, %v1865
      %v1926 = vadd.f32 %v1727, %v1868
      %v1927 = vadd.f32 %v1728, %v1873
      %v1928 = vadd.f32 %v1729, %v1876
      %v1929 = vadd.f32 %v1730, %v1881
      %v1930 = vadd.f32 %v1731, %v1884
      %v1931 = vadd.f32 %v1732, %v1889
      %v1932 = vadd.f32 %v1733, %v1892
      %v1933 = vadd.f32 %v1734, %v1897
      %v1934 = vadd.f32 %v1735, %v1900
      %v1936 = vsel %vm724, %v220, 0
      %1938 = vmatprep.subr.bf16.mxu0 0
      %1939 = vmatpush1.bf16.msra.mxu0 %v1936
      %1940 = vmatprep.subr.bf16.mxu0 0
      %1941 = vmatpush1.bf16.msra.mxu0 0
      %1942 = vmatprep.subr.bf16.mxu0 0
      %1943 = vmatpush1.bf16.msra.mxu0 0
      %1944 = vmatprep.subr.bf16.mxu0 0
      %1945 = vmatpush1.bf16.msra.mxu0 0
      %1946 = vmatprep.subr.bf16.mxu0 0
      %1947 = vmatpush1.bf16.msra.mxu0 0
      %1948 = vmatprep.subr.bf16.mxu0 0
      %1949 = vmatpush1.bf16.msra.mxu0 0
      %1950 = vmatprep.subr.bf16.mxu0 0
      %1951 = vmatpush1.bf16.msra.mxu0 0
      %1952 = vmatprep.subr.bf16.mxu0 0
      %1953 = vmatpush1.bf16.msra.mxu0 0
      %1954 = vmatprep.subr.bf16.mxu0 0
      %1955 = vmatpush1.bf16.msra.mxu0 0
      %1956 = vmatprep.subr.bf16.mxu0 0
      %1957 = vmatpush1.bf16.msra.mxu0 0
      %1958 = vmatprep.subr.bf16.mxu0 0
      %1959 = vmatpush1.bf16.msra.mxu0 0
      %1960 = vmatprep.subr.bf16.mxu0 0
      %1961 = vmatpush1.bf16.msra.mxu0 0
      %1962 = vmatprep.subr.bf16.mxu0 0
      %1963 = vmatpush1.bf16.msra.mxu0 0
      %1964 = vmatprep.subr.bf16.mxu0 0
      %1965 = vmatpush1.bf16.msra.mxu0 0
      %1966 = vmatprep.subr.bf16.mxu0 0
      %1967 = vmatpush1.bf16.msra.mxu0 0
      %1968 = vmatprep.subr.bf16.mxu0 0
      %1969 = vmatpush1.bf16.msra.mxu0 0
      %1970 = vmatprep.mubr.bf16.mxu0 0
      %1971 = vmatmul.mubr.bf16.gmra.mrb[0].mxu0 %v890
      %v1972 = vpop.f32.mrb[0].mxu0
      %v1973 = vadd.f32 0.0, %v1972
      %v1974 = vpop.f32.mrb[0].mxu0
      %v1975 = vpop.f32.mrb[0].mxu0
      %v1976 = vadd.f32 0.0, %v1975
      %v1977 = vpop.f32.mrb[0].mxu0
      %1978 = vmatprep.mubr.bf16.mxu0 0
      %1979 = vmatmul.mubr.bf16.gmra.mrb[0].mxu0 %v896
      %v1980 = vpop.f32.mrb[0].mxu0
      %v1981 = vadd.f32 0.0, %v1980
      %v1982 = vpop.f32.mrb[0].mxu0
      %v1983 = vpop.f32.mrb[0].mxu0
      %v1984 = vadd.f32 0.0, %v1983
      %v1985 = vpop.f32.mrb[0].mxu0
      %1986 = vmatprep.mubr.bf16.mxu0 0
      %1987 = vmatmul.mubr.bf16.gmra.mrb[0].mxu0 %v899
      %v1988 = vpop.f32.mrb[0].mxu0
      %v1989 = vadd.f32 0.0, %v1988
      %v1990 = vpop.f32.mrb[0].mxu0
      %v1991 = vpop.f32.mrb[0].mxu0
      %v1992 = vadd.f32 0.0, %v1991
      %v1993 = vpop.f32.mrb[0].mxu0
      %1994 = vmatprep.mubr.bf16.mxu0 0
      %1995 = vmatmul.mubr.bf16.gmra.mrb[0].mxu0 %v902
      %v1996 = vpop.f32.mrb[0].mxu0
      %v1997 = vadd.f32 0.0, %v1996
      %v1998 = vpop.f32.mrb[0].mxu0
      %v1999 = vpop.f32.mrb[0].mxu0
      %v2000 = vadd.f32 0.0, %v1999
      %v2001 = vpop.f32.mrb[0].mxu0
      %2002 = vmatprep.mubr.bf16.mxu0 0
      %2003 = vmatmul.mubr.bf16.gmra.mrb[0].mxu0 %v905
      %v2004 = vpop.f32.mrb[0].mxu0
      %v2005 = vadd.f32 0.0, %v2004
      %v2006 = vpop.f32.mrb[0].mxu0
      %v2007 = vpop.f32.mrb[0].mxu0
      %v2008 = vadd.f32 0.0, %v2007
      %v2009 = vpop.f32.mrb[0].mxu0
      %2010 = vmatprep.mubr.bf16.mxu0 0
      %2011 = vmatmul.mubr.bf16.gmra.mrb[0].mxu0 %v908
      %v2012 = vpop.f32.mrb[0].mxu0
      %v2013 = vadd.f32 0.0, %v2012
      %v2014 = vpop.f32.mrb[0].mxu0
      %v2015 = vpop.f32.mrb[0].mxu0
      %v2016 = vadd.f32 0.0, %v2015
      %v2017 = vpop.f32.mrb[0].mxu0
      %2018 = vmatprep.mubr.bf16.mxu0 0
      %2019 = vmatmul.mubr.bf16.gmra.mrb[0].mxu0 %v911
      %v2020 = vpop.f32.mrb[0].mxu0
      %v2021 = vadd.f32 0.0, %v2020
      %v2022 = vpop.f32.mrb[0].mxu0
      %v2023 = vpop.f32.mrb[0].mxu0
      %v2024 = vadd.f32 0.0, %v2023
      %v2025 = vpop.f32.mrb[0].mxu0
      %2026 = vmatprep.mubr.bf16.mxu0 0
      %2027 = vmatmul.mubr.bf16.gmra.mrb[0].mxu0 %v914
      %v2028 = vpop.f32.mrb[0].mxu0
      %v2029 = vadd.f32 0.0, %v2028
      %v2030 = vpop.f32.mrb[0].mxu0
      %v2031 = vpop.f32.mrb[0].mxu0
      %v2032 = vadd.f32 0.0, %v2031
      %v2033 = vpop.f32.mrb[0].mxu0
      %2034 = vmatprep.mubr.bf16.mxu0 0
      %2035 = vmatmul.mubr.bf16.gmra.mrb[0].mxu0 %v917
      %v2036 = vpop.f32.mrb[0].mxu0
      %v2037 = vadd.f32 0.0, %v2036
      %v2038 = vpop.f32.mrb[0].mxu0
      %v2039 = vpop.f32.mrb[0].mxu0
      %v2040 = vadd.f32 0.0, %v2039
      %v2041 = vpop.f32.mrb[0].mxu0
      %2042 = vmatprep.mubr.bf16.mxu0 0
      %2043 = vmatmul.mubr.bf16.gmra.mrb[0].mxu0 %v920
      %v2044 = vpop.f32.mrb[0].mxu0
      %v2045 = vadd.f32 0.0, %v2044
      %v2046 = vpop.f32.mrb[0].mxu0
      %v2047 = vpop.f32.mrb[0].mxu0
      %v2048 = vadd.f32 0.0, %v2047
      %v2049 = vpop.f32.mrb[0].mxu0
      %2050 = vmatprep.mubr.bf16.mxu0 0
      %2051 = vmatmul.mubr.bf16.gmra.mrb[0].mxu0 %v923
      %v2052 = vpop.f32.mrb[0].mxu0
      %v2053 = vadd.f32 0.0, %v2052
      %v2054 = vpop.f32.mrb[0].mxu0
      %v2055 = vpop.f32.mrb[0].mxu0
      %v2056 = vadd.f32 0.0, %v2055
      %v2057 = vpop.f32.mrb[0].mxu0
      %2058 = vmatprep.mubr.bf16.mxu0 0
      %2059 = vmatmul.mubr.bf16.gmra.mrb[0].mxu0 %v926
      %v2060 = vpop.f32.mrb[0].mxu0
      %v2061 = vadd.f32 0.0, %v2060
      %v2062 = vpop.f32.mrb[0].mxu0
      %v2063 = vpop.f32.mrb[0].mxu0
      %v2064 = vadd.f32 0.0, %v2063
      %v2065 = vpop.f32.mrb[0].mxu0
      %2066 = vmatprep.mubr.bf16.mxu0 0
      %2067 = vmatmul.mubr.bf16.gmra.mrb[0].mxu0 %v929
      %v2068 = vpop.f32.mrb[0].mxu0
      %v2069 = vadd.f32 0.0, %v2068
      %v2070 = vpop.f32.mrb[0].mxu0
      %v2071 = vpop.f32.mrb[0].mxu0
      %v2072 = vadd.f32 0.0, %v2071
      %v2073 = vpop.f32.mrb[0].mxu0
      %2074 = vmatprep.mubr.bf16.mxu0 0
      %2075 = vmatmul.mubr.bf16.gmra.mrb[0].mxu0 %v932
      %v2076 = vpop.f32.mrb[0].mxu0
      %v2077 = vadd.f32 0.0, %v2076
      %v2078 = vpop.f32.mrb[0].mxu0
      %v2079 = vpop.f32.mrb[0].mxu0
      %v2080 = vadd.f32 0.0, %v2079
      %v2081 = vpop.f32.mrb[0].mxu0
      %2082 = vmatprep.mubr.bf16.mxu0 0
      %2083 = vmatmul.mubr.bf16.gmra.mrb[0].mxu0 %v1340
      %v2084 = vpop.f32.mrb[0].mxu0
      %v2085 = vadd.f32 0.0, %v2084
      %v2086 = vpop.f32.mrb[0].mxu0
      %v2087 = vpop.f32.mrb[0].mxu0
      %v2088 = vadd.f32 0.0, %v2087
      %v2089 = vpop.f32.mrb[0].mxu0
      %2090 = vmatprep.mubr.bf16.mxu0 0
      %2091 = vmatmul.mubr.bf16.gmra.mrb[0].mxu0 %v932
      %v2092 = vpop.f32.mrb[0].mxu0
      %v2093 = vadd.f32 0.0, %v2092
      %v2094 = vpop.f32.mrb[0].mxu0
      %v2095 = vpop.f32.mrb[0].mxu0
      %v2096 = vadd.f32 0.0, %v2095
      %v2097 = vpop.f32.mrb[0].mxu0
      %2098 = vdwg.mxu0
      %v2099 = vadd.f32 %v1903, %v1973
      %v2100 = vadd.f32 %v1904, %v1976
      %v2101 = vadd.f32 %v1905, %v1981
      %v2102 = vadd.f32 %v1906, %v1984
      %v2103 = vadd.f32 %v1907, %v1989
      %v2104 = vadd.f32 %v1908, %v1992
      %v2105 = vadd.f32 %v1909, %v1997
      %v2106 = vadd.f32 %v1910, %v2000
      %v2107 = vadd.f32 %v1911, %v2005
      %v2108 = vadd.f32 %v1912, %v2008
      %v2109 = vadd.f32 %v1913, %v2013
      %v2110 = vadd.f32 %v1914, %v2016
      %v2111 = vadd.f32 %v1915, %v2021
      %v2112 = vadd.f32 %v1916, %v2024
      %v2113 = vadd.f32 %v1917, %v2029
      %v2114 = vadd.f32 %v1918, %v2032
      %v2115 = vadd.f32 %v1919, %v2037
      %v2116 = vadd.f32 %v1920, %v2040
      %v2117 = vadd.f32 %v1921, %v2045
      %v2118 = vadd.f32 %v1922, %v2048
      %v2119 = vadd.f32 %v1923, %v2053
      %v2120 = vadd.f32 %v1924, %v2056
      %v2121 = vadd.f32 %v1925, %v2061
      %v2122 = vadd.f32 %v1926, %v2064
      %v2123 = vadd.f32 %v1927, %v2069
      %v2124 = vadd.f32 %v1928, %v2072
      %v2125 = vadd.f32 %v1929, %v2077
      %v2126 = vadd.f32 %v1930, %v2080
      %v2127 = vadd.f32 %v1931, %v2085
      %v2128 = vadd.f32 %v1932, %v2088
      %v2129 = vadd.f32 %v1933, %v2093
      %v2130 = vadd.f32 %v1934, %v2096
      %v2132 = vsel %vm724, %v221, 0
      %2134 = vmatprep.subr.bf16.mxu0 0
      %2135 = vmatpush1.bf16.msra.mxu0 %v2132
      %2136 = vmatprep.subr.bf16.mxu0 0
      %2137 = vmatpush1.bf16.msra.mxu0 0
      %2138 = vmatprep.subr.bf16.mxu0 0
      %2139 = vmatpush1.bf16.msra.mxu0 0
      %2140 = vmatprep.subr.bf16.mxu0 0
      %2141 = vmatpush1.bf16.msra.mxu0 0
      %2142 = vmatprep.subr.bf16.mxu0 0
      %2143 = vmatpush1.bf16.msra.mxu0 0
      %2144 = vmatprep.subr.bf16.mxu0 0
      %2145 = vmatpush1.bf16.msra.mxu0 0
      %2146 = vmatprep.subr.bf16.mxu0 0
      %2147 = vmatpush1.bf16.msra.mxu0 0
      %2148 = vmatprep.subr.bf16.mxu0 0
      %2149 = vmatpush1.bf16.msra.mxu0 0
      %2150 = vmatprep.subr.bf16.mxu0 0
      %2151 = vmatpush1.bf16.msra.mxu0 0
      %2152 = vmatprep.subr.bf16.mxu0 0
      %2153 = vmatpush1.bf16.msra.mxu0 0
      %2154 = vmatprep.subr.bf16.mxu0 0
      %2155 = vmatpush1.bf16.msra.mxu0 0
      %2156 = vmatprep.subr.bf16.mxu0 0
      %2157 = vmatpush1.bf16.msra.mxu0 0
      %2158 = vmatprep.subr.bf16.mxu0 0
      %2159 = vmatpush1.bf16.msra.mxu0 0
      %2160 = vmatprep.subr.bf16.mxu0 0
      %2161 = vmatpush1.bf16.msra.mxu0 0
      %2162 = vmatprep.subr.bf16.mxu0 0
      %2163 = vmatpush1.bf16.msra.mxu0 0
      %2164 = vmatprep.subr.bf16.mxu0 0
      %2165 = vmatpush1.bf16.msra.mxu0 0
      %2166 = vmatprep.mubr.bf16.mxu0 0
      %2167 = vmatmul.mubr.bf16.gmra.mrb[0].mxu0 %v694
      %v2168 = vpop.f32.mrb[0].mxu0
      %v2169 = vadd.f32 0.0, %v2168
      %v2170 = vpop.f32.mrb[0].mxu0
      %v2171 = vpop.f32.mrb[0].mxu0
      %v2172 = vadd.f32 0.0, %v2171
      %v2173 = vpop.f32.mrb[0].mxu0
      %2174 = vmatprep.mubr.bf16.mxu0 0
      %2175 = vmatmul.mubr.bf16.gmra.mrb[0].mxu0 %v698
      %v2176 = vpop.f32.mrb[0].mxu0
      %v2177 = vadd.f32 0.0, %v2176
      %v2178 = vpop.f32.mrb[0].mxu0
      %v2179 = vpop.f32.mrb[0].mxu0
      %v2180 = vadd.f32 0.0, %v2179
      %v2181 = vpop.f32.mrb[0].mxu0
      %2182 = vmatprep.mubr.bf16.mxu0 0
      %2183 = vmatmul.mubr.bf16.gmra.mrb[0].mxu0 %v700
      %v2184 = vpop.f32.mrb[0].mxu0
      %v2185 = vadd.f32 0.0, %v2184
      %v2186 = vpop.f32.mrb[0].mxu0
      %v2187 = vpop.f32.mrb[0].mxu0
      %v2188 = vadd.f32 0.0, %v2187
      %v2189 = vpop.f32.mrb[0].mxu0
      %2190 = vmatprep.mubr.bf16.mxu0 0
      %2191 = vmatmul.mubr.bf16.gmra.mrb[0].mxu0 %v702
      %v2192 = vpop.f32.mrb[0].mxu0
      %v2193 = vadd.f32 0.0, %v2192
      %v2194 = vpop.f32.mrb[0].mxu0
      %v2195 = vpop.f32.mrb[0].mxu0
      %v2196 = vadd.f32 0.0, %v2195
      %v2197 = vpop.f32.mrb[0].mxu0
      %2198 = vmatprep.mubr.bf16.mxu0 0
      %2199 = vmatmul.mubr.bf16.gmra.mrb[0].mxu0 %v704
      %v2200 = vpop.f32.mrb[0].mxu0
      %v2201 = vadd.f32 0.0, %v2200
      %v2202 = vpop.f32.mrb[0].mxu0
      %v2203 = vpop.f32.mrb[0].mxu0
      %v2204 = vadd.f32 0.0, %v2203
      %v2205 = vpop.f32.mrb[0].mxu0
      %2206 = vmatprep.mubr.bf16.mxu0 0
      %2207 = vmatmul.mubr.bf16.gmra.mrb[0].mxu0 %v706
      %v2208 = vpop.f32.mrb[0].mxu0
      %v2209 = vadd.f32 0.0, %v2208
      %v2210 = vpop.f32.mrb[0].mxu0
      %v2211 = vpop.f32.mrb[0].mxu0
      %v2212 = vadd.f32 0.0, %v2211
      %v2213 = vpop.f32.mrb[0].mxu0
      %2214 = vmatprep.mubr.bf16.mxu0 0
      %2215 = vmatmul.mubr.bf16.gmra.mrb[0].mxu0 %v708
      %v2216 = vpop.f32.mrb[0].mxu0
      %v2217 = vadd.f32 0.0, %v2216
      %v2218 = vpop.f32.mrb[0].mxu0
      %v2219 = vpop.f32.mrb[0].mxu0
      %v2220 = vadd.f32 0.0, %v2219
      %v2221 = vpop.f32.mrb[0].mxu0
      %2222 = vmatprep.mubr.bf16.mxu0 0
      %2223 = vmatmul.mubr.bf16.gmra.mrb[0].mxu0 %v710
      %v2224 = vpop.f32.mrb[0].mxu0
      %v2225 = vadd.f32 0.0, %v2224
      %v2226 = vpop.f32.mrb[0].mxu0
      %v2227 = vpop.f32.mrb[0].mxu0
      %v2228 = vadd.f32 0.0, %v2227
      %v2229 = vpop.f32.mrb[0].mxu0
      %2230 = vmatprep.mubr.bf16.mxu0 0
      %2231 = vmatmul.mubr.bf16.gmra.mrb[0].mxu0 %v712
      %v2232 = vpop.f32.mrb[0].mxu0
      %v2233 = vadd.f32 0.0, %v2232
      %v2234 = vpop.f32.mrb[0].mxu0
      %v2235 = vpop.f32.mrb[0].mxu0
      %v2236 = vadd.f32 0.0, %v2235
      %v2237 = vpop.f32.mrb[0].mxu0
      %2238 = vmatprep.mubr.bf16.mxu0 0
      %2239 = vmatmul.mubr.bf16.gmra.mrb[0].mxu0 %v714
      %v2240 = vpop.f32.mrb[0].mxu0
      %v2241 = vadd.f32 0.0, %v2240
      %v2242 = vpop.f32.mrb[0].mxu0
      %v2243 = vpop.f32.mrb[0].mxu0
      %v2244 = vadd.f32 0.0, %v2243
      %v2245 = vpop.f32.mrb[0].mxu0
      %2246 = vmatprep.mubr.bf16.mxu0 0
      %2247 = vmatmul.mubr.bf16.gmra.mrb[0].mxu0 %v716
      %v2248 = vpop.f32.mrb[0].mxu0
      %v2249 = vadd.f32 0.0, %v2248
      %v2250 = vpop.f32.mrb[0].mxu0
      %v2251 = vpop.f32.mrb[0].mxu0
      %v2252 = vadd.f32 0.0, %v2251
      %v2253 = vpop.f32.mrb[0].mxu0
      %2254 = vmatprep.mubr.bf16.mxu0 0
      %2255 = vmatmul.mubr.bf16.gmra.mrb[0].mxu0 %v718
      %v2256 = vpop.f32.mrb[0].mxu0
      %v2257 = vadd.f32 0.0, %v2256
      %v2258 = vpop.f32.mrb[0].mxu0
      %v2259 = vpop.f32.mrb[0].mxu0
      %v2260 = vadd.f32 0.0, %v2259
      %v2261 = vpop.f32.mrb[0].mxu0
      %2262 = vmatprep.mubr.bf16.mxu0 0
      %2263 = vmatmul.mubr.bf16.gmra.mrb[0].mxu0 %v720
      %v2264 = vpop.f32.mrb[0].mxu0
      %v2265 = vadd.f32 0.0, %v2264
      %v2266 = vpop.f32.mrb[0].mxu0
      %v2267 = vpop.f32.mrb[0].mxu0
      %v2268 = vadd.f32 0.0, %v2267
      %v2269 = vpop.f32.mrb[0].mxu0
      %2270 = vmatprep.mubr.bf16.mxu0 0
      %2271 = vmatmul.mubr.bf16.gmra.mrb[0].mxu0 %v722
      %v2272 = vpop.f32.mrb[0].mxu0
      %v2273 = vadd.f32 0.0, %v2272
      %v2274 = vpop.f32.mrb[0].mxu0
      %v2275 = vpop.f32.mrb[0].mxu0
      %v2276 = vadd.f32 0.0, %v2275
      %v2277 = vpop.f32.mrb[0].mxu0
      %2278 = vmatprep.mubr.bf16.mxu0 0
      %2279 = vmatmul.mubr.bf16.gmra.mrb[0].mxu0 %v1538
      %v2280 = vpop.f32.mrb[0].mxu0
      %v2281 = vadd.f32 0.0, %v2280
      %v2282 = vpop.f32.mrb[0].mxu0
      %v2283 = vpop.f32.mrb[0].mxu0
      %v2284 = vadd.f32 0.0, %v2283
      %v2285 = vpop.f32.mrb[0].mxu0
      %2286 = vmatprep.mubr.bf16.mxu0 0
      %2287 = vmatmul.mubr.bf16.gmra.mrb[0].mxu0 %v722
      %v2288 = vpop.f32.mrb[0].mxu0
      %v2289 = vadd.f32 0.0, %v2288
      %v2290 = vpop.f32.mrb[0].mxu0
      %v2291 = vpop.f32.mrb[0].mxu0
      %v2292 = vadd.f32 0.0, %v2291
      %v2293 = vpop.f32.mrb[0].mxu0
      %2294 = vdwg.mxu0
      %v2295 = vadd.f32 %v2099, %v2169
      %v2296 = vadd.f32 %v2100, %v2172
      %v2297 = vadd.f32 %v2101, %v2177
      %v2298 = vadd.f32 %v2102, %v2180
      %v2299 = vadd.f32 %v2103, %v2185
      %v2300 = vadd.f32 %v2104, %v2188
      %v2301 = vadd.f32 %v2105, %v2193
      %v2302 = vadd.f32 %v2106, %v2196
      %v2303 = vadd.f32 %v2107, %v2201
      %v2304 = vadd.f32 %v2108, %v2204
      %v2305 = vadd.f32 %v2109, %v2209
      %v2306 = vadd.f32 %v2110, %v2212
      %v2307 = vadd.f32 %v2111, %v2217
      %v2308 = vadd.f32 %v2112, %v2220
      %v2309 = vadd.f32 %v2113, %v2225
      %v2310 = vadd.f32 %v2114, %v2228
      %v2311 = vadd.f32 %v2115, %v2233
      %v2312 = vadd.f32 %v2116, %v2236
      %v2313 = vadd.f32 %v2117, %v2241
      %v2314 = vadd.f32 %v2118, %v2244
      %v2315 = vadd.f32 %v2119, %v2249
      %v2316 = vadd.f32 %v2120, %v2252
      %v2317 = vadd.f32 %v2121, %v2257
      %v2318 = vadd.f32 %v2122, %v2260
      %v2319 = vadd.f32 %v2123, %v2265
      %v2320 = vadd.f32 %v2124, %v2268
      %v2321 = vadd.f32 %v2125, %v2273
      %v2322 = vadd.f32 %v2126, %v2276
      %v2323 = vadd.f32 %v2127, %v2281
      %v2324 = vadd.f32 %v2128, %v2284
      %v2325 = vadd.f32 %v2129, %v2289
      %v2326 = vadd.f32 %v2130, %v2292
      %v2328 = vsel %vm724, %v222, 0
      %2330 = vmatprep.subr.bf16.mxu0 0
      %2331 = vmatpush1.bf16.msra.mxu0 %v2328
      %2332 = vmatprep.subr.bf16.mxu0 0
      %2333 = vmatpush1.bf16.msra.mxu0 0
      %2334 = vmatprep.subr.bf16.mxu0 0
      %2335 = vmatpush1.bf16.msra.mxu0 0
      %2336 = vmatprep.subr.bf16.mxu0 0
      %2337 = vmatpush1.bf16.msra.mxu0 0
      %2338 = vmatprep.subr.bf16.mxu0 0
      %2339 = vmatpush1.bf16.msra.mxu0 0
      %2340 = vmatprep.subr.bf16.mxu0 0
      %2341 = vmatpush1.bf16.msra.mxu0 0
      %2342 = vmatprep.subr.bf16.mxu0 0
      %2343 = vmatpush1.bf16.msra.mxu0 0
      %2344 = vmatprep.subr.bf16.mxu0 0
      %2345 = vmatpush1.bf16.msra.mxu0 0
      %2346 = vmatprep.subr.bf16.mxu0 0
      %2347 = vmatpush1.bf16.msra.mxu0 0
      %2348 = vmatprep.subr.bf16.mxu0 0
      %2349 = vmatpush1.bf16.msra.mxu0 0
      %2350 = vmatprep.subr.bf16.mxu0 0
      %2351 = vmatpush1.bf16.msra.mxu0 0
      %2352 = vmatprep.subr.bf16.mxu0 0
      %2353 = vmatpush1.bf16.msra.mxu0 0
      %2354 = vmatprep.subr.bf16.mxu0 0
      %2355 = vmatpush1.bf16.msra.mxu0 0
      %2356 = vmatprep.subr.bf16.mxu0 0
      %2357 = vmatpush1.bf16.msra.mxu0 0
      %2358 = vmatprep.subr.bf16.mxu0 0
      %2359 = vmatpush1.bf16.msra.mxu0 0
      %2360 = vmatprep.subr.bf16.mxu0 0
      %2361 = vmatpush1.bf16.msra.mxu0 0
      %2362 = vmatprep.mubr.bf16.mxu0 0
      %2363 = vmatmul.mubr.bf16.gmra.mrb[0].mxu0 %v1099
      %v2364 = vpop.f32.mrb[0].mxu0
      %v2365 = vadd.f32 0.0, %v2364
      %v2366 = vpop.f32.mrb[0].mxu0
      %v2367 = vpop.f32.mrb[0].mxu0
      %v2368 = vadd.f32 0.0, %v2367
      %v2369 = vpop.f32.mrb[0].mxu0
      %2370 = vmatprep.mubr.bf16.mxu0 0
      %2371 = vmatmul.mubr.bf16.gmra.mrb[0].mxu0 %v1105
      %v2372 = vpop.f32.mrb[0].mxu0
      %v2373 = vadd.f32 0.0, %v2372
      %v2374 = vpop.f32.mrb[0].mxu0
      %v2375 = vpop.f32.mrb[0].mxu0
      %v2376 = vadd.f32 0.0, %v2375
      %v2377 = vpop.f32.mrb[0].mxu0
      %2378 = vmatprep.mubr.bf16.mxu0 0
      %2379 = vmatmul.mubr.bf16.gmra.mrb[0].mxu0 %v1108
      %v2380 = vpop.f32.mrb[0].mxu0
      %v2381 = vadd.f32 0.0, %v2380
      %v2382 = vpop.f32.mrb[0].mxu0
      %v2383 = vpop.f32.mrb[0].mxu0
      %v2384 = vadd.f32 0.0, %v2383
      %v2385 = vpop.f32.mrb[0].mxu0
      %2386 = vmatprep.mubr.bf16.mxu0 0
      %2387 = vmatmul.mubr.bf16.gmra.mrb[0].mxu0 %v1111
      %v2388 = vpop.f32.mrb[0].mxu0
      %v2389 = vadd.f32 0.0, %v2388
      %v2390 = vpop.f32.mrb[0].mxu0
      %v2391 = vpop.f32.mrb[0].mxu0
      %v2392 = vadd.f32 0.0, %v2391
      %v2393 = vpop.f32.mrb[0].mxu0
      %2394 = vmatprep.mubr.bf16.mxu0 0
      %2395 = vmatmul.mubr.bf16.gmra.mrb[0].mxu0 %v1114
      %v2396 = vpop.f32.mrb[0].mxu0
      %v2397 = vadd.f32 0.0, %v2396
      %v2398 = vpop.f32.mrb[0].mxu0
      %v2399 = vpop.f32.mrb[0].mxu0
      %v2400 = vadd.f32 0.0, %v2399
      %v2401 = vpop.f32.mrb[0].mxu0
      %2402 = vmatprep.mubr.bf16.mxu0 0
      %2403 = vmatmul.mubr.bf16.gmra.mrb[0].mxu0 %v1117
      %v2404 = vpop.f32.mrb[0].mxu0
      %v2405 = vadd.f32 0.0, %v2404
      %v2406 = vpop.f32.mrb[0].mxu0
      %v2407 = vpop.f32.mrb[0].mxu0
      %v2408 = vadd.f32 0.0, %v2407
      %v2409 = vpop.f32.mrb[0].mxu0
      %2410 = vmatprep.mubr.bf16.mxu0 0
      %2411 = vmatmul.mubr.bf16.gmra.mrb[0].mxu0 %v1120
      %v2412 = vpop.f32.mrb[0].mxu0
      %v2413 = vadd.f32 0.0, %v2412
      %v2414 = vpop.f32.mrb[0].mxu0
      %v2415 = vpop.f32.mrb[0].mxu0
      %v2416 = vadd.f32 0.0, %v2415
      %v2417 = vpop.f32.mrb[0].mxu0
      %2418 = vmatprep.mubr.bf16.mxu0 0
      %2419 = vmatmul.mubr.bf16.gmra.mrb[0].mxu0 %v1123
      %v2420 = vpop.f32.mrb[0].mxu0
      %v2421 = vadd.f32 0.0, %v2420
      %v2422 = vpop.f32.mrb[0].mxu0
      %v2423 = vpop.f32.mrb[0].mxu0
      %v2424 = vadd.f32 0.0, %v2423
      %v2425 = vpop.f32.mrb[0].mxu0
      %2426 = vmatprep.mubr.bf16.mxu0 0
      %2427 = vmatmul.mubr.bf16.gmra.mrb[0].mxu0 %v1126
      %v2428 = vpop.f32.mrb[0].mxu0
      %v2429 = vadd.f32 0.0, %v2428
      %v2430 = vpop.f32.mrb[0].mxu0
      %v2431 = vpop.f32.mrb[0].mxu0
      %v2432 = vadd.f32 0.0, %v2431
      %v2433 = vpop.f32.mrb[0].mxu0
      %2434 = vmatprep.mubr.bf16.mxu0 0
      %2435 = vmatmul.mubr.bf16.gmra.mrb[0].mxu0 %v1129
      %v2436 = vpop.f32.mrb[0].mxu0
      %v2437 = vadd.f32 0.0, %v2436
      %v2438 = vpop.f32.mrb[0].mxu0
      %v2439 = vpop.f32.mrb[0].mxu0
      %v2440 = vadd.f32 0.0, %v2439
      %v2441 = vpop.f32.mrb[0].mxu0
      %2442 = vmatprep.mubr.bf16.mxu0 0
      %2443 = vmatmul.mubr.bf16.gmra.mrb[0].mxu0 %v1132
      %v2444 = vpop.f32.mrb[0].mxu0
      %v2445 = vadd.f32 0.0, %v2444
      %v2446 = vpop.f32.mrb[0].mxu0
      %v2447 = vpop.f32.mrb[0].mxu0
      %v2448 = vadd.f32 0.0, %v2447
      %v2449 = vpop.f32.mrb[0].mxu0
      %2450 = vmatprep.mubr.bf16.mxu0 0
      %2451 = vmatmul.mubr.bf16.gmra.mrb[0].mxu0 %v1135
      %v2452 = vpop.f32.mrb[0].mxu0
      %v2453 = vadd.f32 0.0, %v2452
      %v2454 = vpop.f32.mrb[0].mxu0
      %v2455 = vpop.f32.mrb[0].mxu0
      %v2456 = vadd.f32 0.0, %v2455
      %v2457 = vpop.f32.mrb[0].mxu0
      %2458 = vmatprep.mubr.bf16.mxu0 0
      %2459 = vmatmul.mubr.bf16.gmra.mrb[0].mxu0 %v1138
      %v2460 = vpop.f32.mrb[0].mxu0
      %v2461 = vadd.f32 0.0, %v2460
      %v2462 = vpop.f32.mrb[0].mxu0
      %v2463 = vpop.f32.mrb[0].mxu0
      %v2464 = vadd.f32 0.0, %v2463
      %v2465 = vpop.f32.mrb[0].mxu0
      %2466 = vmatprep.mubr.bf16.mxu0 0
      %2467 = vmatmul.mubr.bf16.gmra.mrb[0].mxu0 %v1141
      %v2468 = vpop.f32.mrb[0].mxu0
      %v2469 = vadd.f32 0.0, %v2468
      %v2470 = vpop.f32.mrb[0].mxu0
      %v2471 = vpop.f32.mrb[0].mxu0
      %v2472 = vadd.f32 0.0, %v2471
      %v2473 = vpop.f32.mrb[0].mxu0
      %2474 = vmatprep.mubr.bf16.mxu0 0
      %2475 = vmatmul.mubr.bf16.gmra.mrb[0].mxu0 %v1737
      %v2476 = vpop.f32.mrb[0].mxu0
      %v2477 = vadd.f32 0.0, %v2476
      %v2478 = vpop.f32.mrb[0].mxu0
      %v2479 = vpop.f32.mrb[0].mxu0
      %v2480 = vadd.f32 0.0, %v2479
      %v2481 = vpop.f32.mrb[0].mxu0
      %2482 = vmatprep.mubr.bf16.mxu0 0
      %2483 = vmatmul.mubr.bf16.gmra.mrb[0].mxu0 %v1141
      %v2484 = vpop.f32.mrb[0].mxu0
      %v2485 = vadd.f32 0.0, %v2484
      %v2486 = vpop.f32.mrb[0].mxu0
      %v2487 = vpop.f32.mrb[0].mxu0
      %v2488 = vadd.f32 0.0, %v2487
      %v2489 = vpop.f32.mrb[0].mxu0
      %2490 = vdwg.mxu0
      %v2491 = vadd.f32 %v2295, %v2365
      %v2492 = vadd.f32 %v2296, %v2368
      %v2493 = vadd.f32 %v2297, %v2373
      %v2494 = vadd.f32 %v2298, %v2376
      %v2495 = vadd.f32 %v2299, %v2381
      %v2496 = vadd.f32 %v2300, %v2384
      %v2497 = vadd.f32 %v2301, %v2389
      %v2498 = vadd.f32 %v2302, %v2392
      %v2499 = vadd.f32 %v2303, %v2397
      %v2500 = vadd.f32 %v2304, %v2400
      %v2501 = vadd.f32 %v2305, %v2405
      %v2502 = vadd.f32 %v2306, %v2408
      %v2503 = vadd.f32 %v2307, %v2413
      %v2504 = vadd.f32 %v2308, %v2416
      %v2505 = vadd.f32 %v2309, %v2421
      %v2506 = vadd.f32 %v2310, %v2424
      %v2507 = vadd.f32 %v2311, %v2429
      %v2508 = vadd.f32 %v2312, %v2432
      %v2509 = vadd.f32 %v2313, %v2437
      %v2510 = vadd.f32 %v2314, %v2440
      %v2511 = vadd.f32 %v2315, %v2445
      %v2512 = vadd.f32 %v2316, %v2448
      %v2513 = vadd.f32 %v2317, %v2453
      %v2514 = vadd.f32 %v2318, %v2456
      %v2515 = vadd.f32 %v2319, %v2461
      %v2516 = vadd.f32 %v2320, %v2464
      %v2517 = vadd.f32 %v2321, %v2469
      %v2518 = vadd.f32 %v2322, %v2472
      %v2519 = vadd.f32 %v2323, %v2477
      %v2520 = vadd.f32 %v2324, %v2480
      %v2521 = vadd.f32 %v2325, %v2485
      %v2522 = vadd.f32 %v2326, %v2488
      %v2523 = vsel %vm693, %v2491, 0.0
      %v2524 = vsel %vm693, %v2492, 0.0
      %v2525 = vadd.f32 %v2523, %v2524
      %v2526 = vsel %vm693, %v2493, 0.0
      %v2527 = vadd.f32 %v2525, %v2526
      %v2528 = vsel %vm693, %v2494, 0.0
      %v2529 = vadd.f32 %v2527, %v2528
      %v2530 = vsel %vm693, %v2495, 0.0
      %v2531 = vadd.f32 %v2529, %v2530
      %v2532 = vsel %vm693, %v2496, 0.0
      %v2533 = vadd.f32 %v2531, %v2532
      %v2534 = vsel %vm693, %v2497, 0.0
      %v2535 = vadd.f32 %v2533, %v2534
      %v2536 = vsel %vm693, %v2498, 0.0
      %v2537 = vadd.f32 %v2535, %v2536
      %v2538 = vsel %vm693, %v2499, 0.0
      %v2539 = vadd.f32 %v2537, %v2538
      %v2540 = vsel %vm693, %v2500, 0.0
      %v2541 = vadd.f32 %v2539, %v2540
      %v2542 = vsel %vm693, %v2501, 0.0
      %v2543 = vadd.f32 %v2541, %v2542
      %v2544 = vsel %vm693, %v2502, 0.0
      %v2545 = vadd.f32 %v2543, %v2544
      %v2546 = vsel %vm693, %v2503, 0.0
      %v2547 = vadd.f32 %v2545, %v2546
      %v2548 = vsel %vm693, %v2504, 0.0
      %v2549 = vadd.f32 %v2547, %v2548
      %v2550 = vsel %vm693, %v2505, 0.0
      %v2551 = vadd.f32 %v2549, %v2550
      %v2552 = vsel %vm693, %v2506, 0.0
      %v2553 = vadd.f32 %v2551, %v2552
      %v2554 = vsel %vm693, %v2507, 0.0
      %v2555 = vadd.f32 %v2553, %v2554
      %v2556 = vsel %vm693, %v2508, 0.0
      %v2557 = vadd.f32 %v2555, %v2556
      %v2558 = vsel %vm693, %v2509, 0.0
      %v2559 = vadd.f32 %v2557, %v2558
      %v2560 = vsel %vm693, %v2510, 0.0
      %v2561 = vadd.f32 %v2559, %v2560
      %v2562 = vsel %vm693, %v2511, 0.0
      %v2563 = vadd.f32 %v2561, %v2562
      %v2564 = vsel %vm693, %v2512, 0.0
      %v2565 = vadd.f32 %v2563, %v2564
      %v2566 = vsel %vm693, %v2513, 0.0
      %v2567 = vadd.f32 %v2565, %v2566
      %v2568 = vsel %vm693, %v2514, 0.0
      %v2569 = vadd.f32 %v2567, %v2568
      %v2570 = vsel %vm693, %v2515, 0.0
      %v2571 = vadd.f32 %v2569, %v2570
      %v2572 = vsel %vm693, %v2516, 0.0
      %v2573 = vadd.f32 %v2571, %v2572
      %v2574 = vsel %vm693, %v2517, 0.0
      %v2575 = vadd.f32 %v2573, %v2574
      %v2576 = vsel %vm693, %v2518, 0.0
      %v2577 = vadd.f32 %v2575, %v2576
      %v2578 = vsel %vm693, %v2519, 0.0
      %v2579 = vadd.f32 %v2577, %v2578
      %v2580 = vsel %vm693, %v2520, 0.0
      %v2581 = vadd.f32 %v2579, %v2580
      %v2582 = vsel %vm693, %v2521, 0.0
      %v2583 = vadd.f32 %v2581, %v2582
      %v2584 = vsel %vm693, %v2522, 0.0
      %v2585 = vadd.f32 %v2583, %v2584
      %v2586 = vrot.slane %v2585, 4
      %v2587 = vadd.f32 %v2585, %v2586
      %v2588 = vrot.slane %v2587, 2
      %v2589 = vadd.f32 %v2587, %v2588
      %v2590 = vrot.slane %v2589, 1
      %v2591 = vadd.f32 %v2589, %v2590
      %v2592 = vmul.f32 %v2491, %v2491
      %v2593 = vmul.f32 %v2492, %v2492
      %v2594 = vmul.f32 %v2493, %v2493
      %v2595 = vmul.f32 %v2494, %v2494
      %v2596 = vmul.f32 %v2495, %v2495
      %v2597 = vmul.f32 %v2496, %v2496
      %v2598 = vmul.f32 %v2497, %v2497
      %v2599 = vmul.f32 %v2498, %v2498
      %v2600 = vmul.f32 %v2499, %v2499
      %v2601 = vmul.f32 %v2500, %v2500
      %v2602 = vmul.f32 %v2501, %v2501
      %v2603 = vmul.f32 %v2502, %v2502
      %v2604 = vmul.f32 %v2503, %v2503
      %v2605 = vmul.f32 %v2504, %v2504
      %v2606 = vmul.f32 %v2505, %v2505
      %v2607 = vmul.f32 %v2506, %v2506
      %v2608 = vmul.f32 %v2507, %v2507
      %v2609 = vmul.f32 %v2508, %v2508
      %v2610 = vmul.f32 %v2509, %v2509
      %v2611 = vmul.f32 %v2510, %v2510
      %v2612 = vmul.f32 %v2511, %v2511
      %v2613 = vmul.f32 %v2512, %v2512
      %v2614 = vmul.f32 %v2513, %v2513
      %v2615 = vmul.f32 %v2514, %v2514
      %v2616 = vmul.f32 %v2515, %v2515
      %v2617 = vmul.f32 %v2516, %v2516
      %v2618 = vmul.f32 %v2517, %v2517
      %v2619 = vmul.f32 %v2518, %v2518
      %v2620 = vmul.f32 %v2519, %v2519
      %v2621 = vmul.f32 %v2520, %v2520
      %v2622 = vmul.f32 %v2521, %v2521
      %v2623 = vmul.f32 %v2522, %v2522
      %v2624 = vsel %vm693, %v2592, 0.0
      %v2625 = vsel %vm693, %v2593, 0.0
      %v2626 = vadd.f32 %v2624, %v2625
      %v2627 = vsel %vm693, %v2594, 0.0
      %v2628 = vadd.f32 %v2626, %v2627
      %v2629 = vsel %vm693, %v2595, 0.0
      %v2630 = vadd.f32 %v2628, %v2629
      %v2631 = vsel %vm693, %v2596, 0.0
      %v2632 = vadd.f32 %v2630, %v2631
      %v2633 = vsel %vm693, %v2597, 0.0
      %v2634 = vadd.f32 %v2632, %v2633
      %v2635 = vsel %vm693, %v2598, 0.0
      %v2636 = vadd.f32 %v2634, %v2635
      %v2637 = vsel %vm693, %v2599, 0.0
      %v2638 = vadd.f32 %v2636, %v2637
      %v2639 = vsel %vm693, %v2600, 0.0
      %v2640 = vadd.f32 %v2638, %v2639
      %v2641 = vsel %vm693, %v2601, 0.0
      %v2642 = vadd.f32 %v2640, %v2641
      %v2643 = vsel %vm693, %v2602, 0.0
      %v2644 = vadd.f32 %v2642, %v2643
      %v2645 = vsel %vm693, %v2603, 0.0
      %v2646 = vadd.f32 %v2644, %v2645
      %v2647 = vsel %vm693, %v2604, 0.0
      %v2648 = vadd.f32 %v2646, %v2647
      %v2649 = vsel %vm693, %v2605, 0.0
      %v2650 = vadd.f32 %v2648, %v2649
      %v2651 = vsel %vm693, %v2606, 0.0
      %v2652 = vadd.f32 %v2650, %v2651
      %v2653 = vsel %vm693, %v2607, 0.0
      %v2654 = vadd.f32 %v2652, %v2653
      %v2655 = vsel %vm693, %v2608, 0.0
      %v2656 = vadd.f32 %v2654, %v2655
      %v2657 = vsel %vm693, %v2609, 0.0
      %v2658 = vadd.f32 %v2656, %v2657
      %v2659 = vsel %vm693, %v2610, 0.0
      %v2660 = vadd.f32 %v2658, %v2659
      %v2661 = vsel %vm693, %v2611, 0.0
      %v2662 = vadd.f32 %v2660, %v2661
      %v2663 = vsel %vm693, %v2612, 0.0
      %v2664 = vadd.f32 %v2662, %v2663
      %v2665 = vsel %vm693, %v2613, 0.0
      %v2666 = vadd.f32 %v2664, %v2665
      %v2667 = vsel %vm693, %v2614, 0.0
      %v2668 = vadd.f32 %v2666, %v2667
      %v2669 = vsel %vm693, %v2615, 0.0
      %v2670 = vadd.f32 %v2668, %v2669
      %v2671 = vsel %vm693, %v2616, 0.0
      %v2672 = vadd.f32 %v2670, %v2671
      %v2673 = vsel %vm693, %v2617, 0.0
      %v2674 = vadd.f32 %v2672, %v2673
      %v2675 = vsel %vm693, %v2618, 0.0
      %v2676 = vadd.f32 %v2674, %v2675
      %v2677 = vsel %vm693, %v2619, 0.0
      %v2678 = vadd.f32 %v2676, %v2677
      %v2679 = vsel %vm693, %v2620, 0.0
      %v2680 = vadd.f32 %v2678, %v2679
      %v2681 = vsel %vm693, %v2621, 0.0
      %v2682 = vadd.f32 %v2680, %v2681
      %v2683 = vsel %vm693, %v2622, 0.0
      %v2684 = vadd.f32 %v2682, %v2683
      %v2685 = vsel %vm693, %v2623, 0.0
      %v2686 = vadd.f32 %v2684, %v2685
      %v2687 = vrot.slane %v2686, 4
      %v2688 = vadd.f32 %v2686, %v2687
      %v2689 = vrot.slane %v2688, 2
      %v2690 = vadd.f32 %v2688, %v2689
      %v2691 = vrot.slane %v2690, 1
      %v2692 = vadd.f32 %v2690, %v2691
      %v2693 = vmul.f32 %v2591, 0.00390625
      %v2694 = vmul.f32 %v2692, 0.00390625
      %v2695 = vmul.f32 %v2693, %v2693
      %v2696 = vsub.f32 %v2694, %v2695
      %v2697 = vmax.f32 %v2696, 0.0
      %v2698 = vsub.f32 %v2491, %v2693
      %v2699 = vsub.f32 %v2492, %v2693
      %v2700 = vsub.f32 %v2493, %v2693
      %v2701 = vsub.f32 %v2494, %v2693
      %v2702 = vsub.f32 %v2495, %v2693
      %v2703 = vsub.f32 %v2496, %v2693
      %v2704 = vsub.f32 %v2497, %v2693
      %v2705 = vsub.f32 %v2498, %v2693
      %v2706 = vsub.f32 %v2499, %v2693
      %v2707 = vsub.f32 %v2500, %v2693
      %v2708 = vsub.f32 %v2501, %v2693
      %v2709 = vsub.f32 %v2502, %v2693
      %v2710 = vsub.f32 %v2503, %v2693
      %v2711 = vsub.f32 %v2504, %v2693
      %v2712 = vsub.f32 %v2505, %v2693
      %v2713 = vsub.f32 %v2506, %v2693
      %v2714 = vsub.f32 %v2507, %v2693
      %v2715 = vsub.f32 %v2508, %v2693
      %v2716 = vsub.f32 %v2509, %v2693
      %v2717 = vsub.f32 %v2510, %v2693
      %v2718 = vsub.f32 %v2511, %v2693
      %v2719 = vsub.f32 %v2512, %v2693
      %v2720 = vsub.f32 %v2513, %v2693
      %v2721 = vsub.f32 %v2514, %v2693
      %v2722 = vsub.f32 %v2515, %v2693
      %v2723 = vsub.f32 %v2516, %v2693
      %v2724 = vsub.f32 %v2517, %v2693
      %v2725 = vsub.f32 %v2518, %v2693
      %v2726 = vsub.f32 %v2519, %v2693
      %v2727 = vsub.f32 %v2520, %v2693
      %v2728 = vsub.f32 %v2521, %v2693
      %v2729 = vsub.f32 %v2522, %v2693
      %v2730 = vadd.f32 %v2697, 1e-05
      %v2731 = vrsqrt.pop %v2730
      %v2732 = vmul.f32 %v2698, %v2731
      %v2733 = vmul.f32 %v2699, %v2731
      %v2734 = vmul.f32 %v2700, %v2731
      %v2735 = vmul.f32 %v2701, %v2731
      %v2736 = vmul.f32 %v2702, %v2731
      %v2737 = vmul.f32 %v2703, %v2731
      %v2738 = vmul.f32 %v2704, %v2731
      %v2739 = vmul.f32 %v2705, %v2731
      %v2740 = vmul.f32 %v2706, %v2731
      %v2741 = vmul.f32 %v2707, %v2731
      %v2742 = vmul.f32 %v2708, %v2731
      %v2743 = vmul.f32 %v2709, %v2731
      %v2744 = vmul.f32 %v2710, %v2731
      %v2745 = vmul.f32 %v2711, %v2731
      %v2746 = vmul.f32 %v2712, %v2731
      %v2747 = vmul.f32 %v2713, %v2731
      %v2748 = vmul.f32 %v2714, %v2731
      %v2749 = vmul.f32 %v2715, %v2731
      %v2750 = vmul.f32 %v2716, %v2731
      %v2751 = vmul.f32 %v2717, %v2731
      %v2752 = vmul.f32 %v2718, %v2731
      %v2753 = vmul.f32 %v2719, %v2731
      %v2754 = vmul.f32 %v2720, %v2731
      %v2755 = vmul.f32 %v2721, %v2731
      %v2756 = vmul.f32 %v2722, %v2731
      %v2757 = vmul.f32 %v2723, %v2731
      %v2758 = vmul.f32 %v2724, %v2731
      %v2759 = vmul.f32 %v2725, %v2731
      %v2760 = vmul.f32 %v2726, %v2731
      %v2761 = vmul.f32 %v2727, %v2731
      %v2762 = vmul.f32 %v2728, %v2731
      %v2763 = vmul.f32 %v2729, %v2731
      %v2764 = vmax.f32 %v2732, 0.0
      %v2765 = vmax.f32 %v2733, 0.0
      %v2766 = vmax.f32 %v2734, 0.0
      %v2767 = vmax.f32 %v2735, 0.0
      %v2768 = vmax.f32 %v2736, 0.0
      %v2769 = vmax.f32 %v2737, 0.0
      %v2770 = vmax.f32 %v2738, 0.0
      %v2771 = vmax.f32 %v2739, 0.0
      %v2772 = vmax.f32 %v2740, 0.0
      %v2773 = vmax.f32 %v2741, 0.0
      %v2774 = vmax.f32 %v2742, 0.0
      %v2775 = vmax.f32 %v2743, 0.0
      %v2776 = vmax.f32 %v2744, 0.0
      %v2777 = vmax.f32 %v2745, 0.0
      %v2778 = vmax.f32 %v2746, 0.0
      %v2779 = vmax.f32 %v2747, 0.0
      %v2780 = vmax.f32 %v2748, 0.0
      %v2781 = vmax.f32 %v2749, 0.0
      %v2782 = vmax.f32 %v2750, 0.0
      %v2783 = vmax.f32 %v2751, 0.0
      %v2784 = vmax.f32 %v2752, 0.0
      %v2785 = vmax.f32 %v2753, 0.0
      %v2786 = vmax.f32 %v2754, 0.0
      %v2787 = vmax.f32 %v2755, 0.0
      %v2788 = vmax.f32 %v2756, 0.0
      %v2789 = vmax.f32 %v2757, 0.0
      %v2790 = vmax.f32 %v2758, 0.0
      %v2791 = vmax.f32 %v2759, 0.0
      %v2792 = vmax.f32 %v2760, 0.0
      %v2793 = vmax.f32 %v2761, 0.0
      %v2794 = vmax.f32 %v2762, 0.0
      %v2795 = vmax.f32 %v2763, 0.0
      %v2796 = vpack.c.bf16 %v2765, %v2764
      %v2797 = vpack.c.bf16 %v2767, %v2766
      %v2798 = vpack.c.bf16 %v2769, %v2768
      %v2799 = vpack.c.bf16 %v2771, %v2770
      %v2800 = vpack.c.bf16 %v2773, %v2772
      %v2801 = vpack.c.bf16 %v2775, %v2774
      %v2802 = vpack.c.bf16 %v2777, %v2776
      %v2803 = vpack.c.bf16 %v2779, %v2778
      %v2804 = vpack.c.bf16 %v2781, %v2780
      %v2805 = vpack.c.bf16 %v2783, %v2782
      %v2806 = vpack.c.bf16 %v2785, %v2784
      %v2807 = vpack.c.bf16 %v2787, %v2786
      %v2808 = vpack.c.bf16 %v2789, %v2788
      %v2809 = vpack.c.bf16 %v2791, %v2790
      %v2810 = vpack.c.bf16 %v2793, %v2792
      %v2811 = vpack.c.bf16 %v2795, %v2794
      %v2828 = vunpack.c.l.b16 %v2796
      %v2829 = vunpack.c.h.b16 %v2796
      %v2830 = vunpack.c.l.b16 %v2797
      %v2831 = vunpack.c.h.b16 %v2797
      %v2832 = vunpack.c.l.b16 %v2798
      %v2833 = vunpack.c.h.b16 %v2798
      %v2834 = vunpack.c.l.b16 %v2799
      %v2835 = vunpack.c.h.b16 %v2799
      %v2836 = vunpack.c.l.b16 %v2800
      %v2837 = vunpack.c.h.b16 %v2800
      %v2838 = vunpack.c.l.b16 %v2801
      %v2839 = vunpack.c.h.b16 %v2801
      %v2840 = vunpack.c.l.b16 %v2802
      %v2841 = vunpack.c.h.b16 %v2802
      %v2842 = vunpack.c.l.b16 %v2803
      %v2843 = vunpack.c.h.b16 %v2803
      %v2844 = vunpack.c.l.b16 %v2804
      %v2845 = vunpack.c.h.b16 %v2804
      %v2846 = vunpack.c.l.b16 %v2805
      %v2847 = vunpack.c.h.b16 %v2805
      %v2848 = vunpack.c.l.b16 %v2806
      %v2849 = vunpack.c.h.b16 %v2806
      %v2850 = vunpack.c.l.b16 %v2807
      %v2851 = vunpack.c.h.b16 %v2807
      %v2852 = vunpack.c.l.b16 %v2808
      %v2853 = vunpack.c.h.b16 %v2808
      %v2854 = vunpack.c.l.b16 %v2809
      %v2855 = vunpack.c.h.b16 %v2809
      %v2856 = vunpack.c.l.b16 %v2810
      %v2857 = vunpack.c.h.b16 %v2810
      %v2858 = vunpack.c.l.b16 %v2811
      %v2859 = vunpack.c.h.b16 %v2811
      %v2860 = vpack.c.b16 %v2828, %v2828
      %v2861 = vpack.c.b16 %v2829, %v2829
      %v2862 = vpack.c.b16 %v2830, %v2830
      %v2863 = vpack.c.b16 %v2831, %v2831
      %v2864 = vpack.c.b16 %v2832, %v2832
      %v2865 = vpack.c.b16 %v2833, %v2833
      %v2866 = vpack.c.b16 %v2834, %v2834
      %v2867 = vpack.c.b16 %v2835, %v2835
      %v2868 = vpack.c.b16 %v2836, %v2836
      %v2869 = vpack.c.b16 %v2837, %v2837
      %v2870 = vpack.c.b16 %v2838, %v2838
      %v2871 = vpack.c.b16 %v2839, %v2839
      %v2872 = vpack.c.b16 %v2840, %v2840
      %v2873 = vpack.c.b16 %v2841, %v2841
      %v2874 = vpack.c.b16 %v2842, %v2842
      %v2875 = vpack.c.b16 %v2843, %v2843
      %v2876 = vpack.c.b16 %v2844, %v2844
      %v2877 = vpack.c.b16 %v2845, %v2845
      %v2878 = vpack.c.b16 %v2846, %v2846
      %v2879 = vpack.c.b16 %v2847, %v2847
      %v2880 = vpack.c.b16 %v2848, %v2848
      %v2881 = vpack.c.b16 %v2849, %v2849
      %v2882 = vpack.c.b16 %v2850, %v2850
      %v2883 = vpack.c.b16 %v2851, %v2851
      %v2884 = vpack.c.b16 %v2852, %v2852
      %v2885 = vpack.c.b16 %v2853, %v2853
      %v2886 = vpack.c.b16 %v2854, %v2854
      %v2887 = vpack.c.b16 %v2855, %v2855
      %v2888 = vpack.c.b16 %v2856, %v2856
      %v2889 = vpack.c.b16 %v2857, %v2857
      %v2890 = vpack.c.b16 %v2858, %v2858
      %v2891 = vpack.c.b16 %v2859, %v2859
      %vm2924 = vcmask 27648
      %2925 = vst.msk [vmem:[%s180] sm:$0xf] %vm2924, %v2860
      %2926 = vst.msk [vmem:[%s180 + $0x4] sm:$0xf] %vm2924, %v2861
      %2927 = vst.msk [vmem:[%s180 + $0x8] sm:$0xf] %vm2924, %v2862
      %2928 = vst.msk [vmem:[%s180 + $0xc] sm:$0xf] %vm2924, %v2863
      %2929 = vst.msk [vmem:[%s180 + $0x10] sm:$0xf] %vm2924, %v2864
      %2930 = vst.msk [vmem:[%s180 + $0x14] sm:$0xf] %vm2924, %v2865
      %2931 = vst.msk [vmem:[%s180 + $0x18] sm:$0xf] %vm2924, %v2866
      %2932 = vst.msk [vmem:[%s180 + $0x1c] sm:$0xf] %vm2924, %v2867
      %2933 = vst.msk [vmem:[%s180 + $0x20] sm:$0xf] %vm2924, %v2868
      %2934 = vst.msk [vmem:[%s180 + $0x24] sm:$0xf] %vm2924, %v2869
      %2935 = vst.msk [vmem:[%s180 + $0x28] sm:$0xf] %vm2924, %v2870
      %2936 = vst.msk [vmem:[%s180 + $0x2c] sm:$0xf] %vm2924, %v2871
      %2937 = vst.msk [vmem:[%s180 + $0x30] sm:$0xf] %vm2924, %v2872
      %2938 = vst.msk [vmem:[%s180 + $0x34] sm:$0xf] %vm2924, %v2873
      %2939 = vst.msk [vmem:[%s180 + $0x38] sm:$0xf] %vm2924, %v2874
      %2940 = vst.msk [vmem:[%s180 + $0x3c] sm:$0xf] %vm2924, %v2875
      %2941 = vst.msk [vmem:[%s180 + $0x40] sm:$0xf] %vm2924, %v2876
      %2942 = vst.msk [vmem:[%s180 + $0x44] sm:$0xf] %vm2924, %v2877
      %2943 = vst.msk [vmem:[%s180 + $0x48] sm:$0xf] %vm2924, %v2878
      %2944 = vst.msk [vmem:[%s180 + $0x4c] sm:$0xf] %vm2924, %v2879
      %2945 = vst.msk [vmem:[%s180 + $0x50] sm:$0xf] %vm2924, %v2880
      %2946 = vst.msk [vmem:[%s180 + $0x54] sm:$0xf] %vm2924, %v2881
      %2947 = vst.msk [vmem:[%s180 + $0x58] sm:$0xf] %vm2924, %v2882
      %2948 = vst.msk [vmem:[%s180 + $0x5c] sm:$0xf] %vm2924, %v2883
      %2949 = vst.msk [vmem:[%s180 + $0x60] sm:$0xf] %vm2924, %v2884
      %2950 = vst.msk [vmem:[%s180 + $0x64] sm:$0xf] %vm2924, %v2885
      %2951 = vst.msk [vmem:[%s180 + $0x68] sm:$0xf] %vm2924, %v2886
      %2952 = vst.msk [vmem:[%s180 + $0x6c] sm:$0xf] %vm2924, %v2887
      %2953 = vst.msk [vmem:[%s180 + $0x70] sm:$0xf] %vm2924, %v2888
      %2954 = vst.msk [vmem:[%s180 + $0x74] sm:$0xf] %vm2924, %v2889
      %2955 = vst.msk [vmem:[%s180 + $0x78] sm:$0xf] %vm2924, %v2890
      %2956 = vst.msk [vmem:[%s180 + $0x7c] sm:$0xf] %vm2924, %v2891
      %p2957 = scmp.lt.s32.totalorder %s17, 1
      %s2958 = scalar_select %p2957, %s17, 1
      %p2959 = scmp.lt.s32.totalorder %s18, 0
      %s2960 = scalar_select %p2959, %s18, 0
      %s2961 = smul.addr %s2958, 32
      %s2962 = sadd.s32 %s2960, %s2961
      %s2963 = smul.addr %s2962, 4
      %s2964 = scalar_lea.vmem %s2, %s2963
      // Predicated region
      $region29: #{tpu_custom_call.1} parent=27 // pred_check
        %p2965 = pneg %p97
      $region30: #{tpu_custom_call.1} parent=27 // pred_check_branch
        %2967 = sbr.rel (%p2965) target = $region32
      $region31: #{tpu_custom_call.1} parent=27 // pred_region
        _
      $region32: #{tpu_custom_call.1} parent=27 // pred_fallthru
        _
    $region28: #{tpu_custom_call.1} parent=5 // pred_fallthru
      _
    %p2968 = scmp.le.s32.totalorder 2, %s8
    // Predicated region
    $region33: #{tpu_custom_call.1} parent=5 // pred_check
      %p2969 = pneg %p2968
    $region34: #{tpu_custom_call.1} parent=5 // pred_check_branch
      %2971 = sbr.rel (%p2969) target = $region36
    $region35: #{tpu_custom_call.1} parent=5 // pred_region
      %s2972 = ssub.s32 %s8, 2
      // Predicated region
      $region37: #{tpu_custom_call.1} parent=35 // pred_check
        %p2973 = pneg %p103
      $region38: #{tpu_custom_call.1} parent=35 // pred_check_branch
        %2975 = sbr.rel (%p2973) target = $region40
      $region39: #{tpu_custom_call.1} parent=35 // pred_region
        %p2976 = scmp.lt.s32.totalorder %s19, 1
        %s2977 = scalar_select %p2976, %s19, 1
        %p2978 = scmp.lt.s32.totalorder %s20, 0
        %s2979 = scalar_select %p2978, %s20, 0
        %s2980 = smul.addr %s2977, 32
        %s2981 = sadd.s32 %s2979, %s2980
        %s2982 = smul.addr %s2981, 4
        %s2983 = scalar_lea.vmem %s2, %s2982
      $region40: #{tpu_custom_call.1} parent=35 // pred_fallthru
        _
    $region36: #{tpu_custom_call.1} parent=5 // pred_fallthru
      _
  $region6: #{tpu_custom_call.1} parent=0 // loop_footer
    %s12 = sadd.s32 1, %s8
  $region7: #{tpu_custom_call.1} parent=0 // loop_footer_branch
    %7 = sbr.rel target = $region3
  $region8: #{tpu_custom_call.1} parent=0 // loop_exit
    _

</llo_original>
